<compile_context>
chip_gen: v5e
topology: v5e:2x2
jax: 0.10.0
libtpu: 0.0.40
codegen_flags: <defaults>
</compile_context>

<pallas_src>
import jax
import jax.numpy as jnp
import numpy as np
from jax import lax
from jax.experimental import pallas as pl
from jax.experimental.pallas import tpu as pltpu

EPS = 1e-5  # nn.BatchNorm2d default eps


def input_part_forward(x_nchw, params, *, tm_max=1024):
    w = params["w"]                       # (Cout, Cin, KH, KW)
    gamma, beta = params["gamma"], params["beta"]
    # params["b"] (conv bias) is intentionally unused: with train-mode BatchNorm directly after
    # the conv, a per-channel constant bias is exactly cancelled by the batch-mean subtraction
    # (Var(x+b) == Var(x), (x+b) - (mean+b) == x - mean), so dropping it saves VPU/DMA work.

    N, Cin, H, W = x_nchw.shape
    Cout, _, KH, KW = w.shape
    stride, pad = 2, 3
    Ho = (H + 2 * pad - KH) // stride + 1
    Wo = (W + 2 * pad - KW) // stride + 1
    KWC = KW * Cin                        # 21
    K = KH * KWC                          # 147
    M = N * Ho * Wo

    # MaxPool2d(3, 2, 1) geometry
    Hp = (Ho + 2 - 3) // 2 + 1
    Wp = (Wo + 2 - 3) // 2 + 1

    # ---- row-tile size: k output rows per grid step, with k | Ho so M_pad == M (no mask) ----
    k = min(Ho, max(1, tm_max // max(Wo, 1)))
    while Ho % k:
        k -= 1
    TM = k * Wo
    HT = Ho // k

    # ---- host glue: W-direction im2col + input-row-parity split, built straight from NCHW ----
    # xwe/xwo[n, hh, wo, dw*Cin + c] = xpad[n, c, 2*hh (+1), 2*wo + dw]; bf16, ~1.8x input bytes.
    Hh = Ho + 3                           # rows per parity plane
    Hpad2 = 2 * Hh
    xpad = jnp.pad(x_nchw.astype(jnp.float32),
                   ((0, 0), (0, 0), (pad, Hpad2 - H - pad), (pad, pad)))
    slabs = [xpad[:, :, :, dw:dw + 2 * Wo:2] for dw in range(KW)]    # each (N, Cin, Hpad2, Wo)
    xw = jnp.stack(slabs, axis=3)                                     # (N, Cin, Hpad2, KW, Wo)
    xw = jnp.transpose(xw, (0, 2, 4, 3, 1)).reshape(N, Hpad2, Wo, KWC)
    xw = xw.reshape(N, Hh, 2, Wo, KWC).astype(jnp.bfloat16)
    xwe = xw[:, :, 0]                                                 # even padded rows
    xwo = xw[:, :, 1]                                                 # odd padded rows

    # weights: (Cout, Cin, KH, KW) -> (KH, KW, Cin, Cout) -> (K, Cout), bf16 for the MXU
    w_mat = jnp.transpose(w, (2, 3, 1, 0)).reshape(K, Cout).astype(jnp.bfloat16)

    # ---- K1: in-VMEM patch assembly + bf16 matmul + per-tile partial BN statistics ----
    def conv_stats_kernel(xwe_ref, xwo_ref, w_ref, conv_ref, stats_ref, patch_ref):
        t = pl.program_id(1)
        h0 = t * k
        # assemble the (TM, K) bf16 patch tile: one contiguous (Wo, KWC) strip copy per
        # (kernel row dh, tile output row r) from the per-image-resident xw block.
        for dh in range(KH):
            src_ref = xwe_ref if dh % 2 == 0 else xwo_ref
            c0 = dh * KWC
            for r in range(k):
                patch_ref[r * Wo:(r + 1) * Wo, c0:c0 + KWC] = src_ref[h0 + r + dh // 2, :, :]
        acc = jnp.dot(patch_ref[...], w_ref[...],
                      preferred_element_type=jnp.float32)             # (TM, Cout) f32 on MXU
        conv_ref[...] = acc.astype(jnp.bfloat16)
        # exact per-tile BN partial statistics (no padded rows -> no mask); two separate writes
        stats_ref[0:1, :] = jnp.sum(acc, axis=0, keepdims=True)
        stats_ref[1:2, :] = jnp.sum(acc * acc, axis=0, keepdims=True)

    cost = pl.CostEstimate(
        flops=2 * M * K * Cout,
        transcendentals=0,
        bytes_accessed=2 * (2 * N * Hh * Wo * KWC + K * Cout + M * Cout) + 4 * N * HT * 2 * Cout,
    )

    conv_out, stats = pl.pallas_call(
        conv_stats_kernel,
        out_shape=(
            jax.ShapeDtypeStruct((M, Cout), jnp.bfloat16),
            jax.ShapeDtypeStruct((N * HT, 2, Cout), jnp.float32),
        ),
        grid=(N, HT),
        in_specs=[
            pl.BlockSpec((None, Hh, Wo, KWC), lambda n, t: (n, 0, 0, 0)),  # xw even: per-image resident
            pl.BlockSpec((None, Hh, Wo, KWC), lambda n, t: (n, 0, 0, 0)),  # xw odd:  per-image resident
            pl.BlockSpec((K, Cout), lambda n, t: (0, 0)),                  # weights: resident
        ],
        out_specs=(
            pl.BlockSpec((TM, Cout), lambda n, t: (n * HT + t, 0)),
            pl.BlockSpec((None, 2, Cout), lambda n, t: (n * HT + t, 0, 0)),
        ),
        scratch_shapes=[pltpu.VMEM((TM, K), jnp.bfloat16)],
        compiler_params=pltpu.CompilerParams(
            dimension_semantics=("parallel", "arbitrary")),
        cost_estimate=cost,
    )(xwe, xwo, w_mat)

    # ---- host: combine partial stats; fold BN (train-mode batch stats) into scale/shift ----
    sums = jnp.sum(stats[:, 0, :], axis=0)
    sumsq = jnp.sum(stats[:, 1, :], axis=0)
    cnt = jnp.float32(M)
    mean = sums / cnt
    var = jnp.maximum(sumsq / cnt - mean * mean, 0.0)                  # biased variance (PyTorch)
    inv = lax.rsqrt(var + EPS)
    g32 = gamma.astype(jnp.float32)
    scale = (g32 * inv).reshape(1, Cout)
    shift = (beta.astype(jnp.float32) - g32 * inv * mean).reshape(1, Cout)

    conv4 = conv_out.reshape(N, Ho, Wo, Cout)                          # free metadata-only reshape

    # ---- K2: fused BN-apply + ReLU + MaxPool2d(3, 2, 1), one image per grid step ----
    def bn_relu_pool_kernel(c_ref, sc_ref, sh_ref, o_ref, wbuf, hbuf):
        # BN apply + ReLU in f32 (bf16 only feeds the MXU / HBM streams; v5e has no bf16 VPU)
        y = jnp.maximum(c_ref[...].astype(jnp.float32) * sc_ref[...] + sh_ref[...], 0.0)
        # W-direction max over 3 taps, stride 2; zero halo is exact post-ReLU.
        zcol = jnp.zeros((Ho, 1, Cout), jnp.float32)
        wbuf[:, 0:1, :] = zcol                                          # halo only (interior is
        wbuf[:, Wo + 1:Wo + 2, :] = zcol                                # fully overwritten below)
        wbuf[:, 1:Wo + 1, :] = y
        wm = jnp.maximum(
            jnp.maximum(wbuf[:, pl.ds(0, Wp, stride=2), :],
                        wbuf[:, pl.ds(1, Wp, stride=2), :]),
            wbuf[:, pl.ds(2, Wp, stride=2), :])                         # (Ho, Wp, C)
        # H-direction max over 3 taps, stride 2
        zrow = jnp.zeros((1, Wp, Cout), jnp.float32)
        hbuf[0:1, :, :] = zrow
        hbuf[Ho + 1:Ho + 2, :, :] = zrow
        hbuf[1:Ho + 1, :, :] = wm
        o_ref[...] = jnp.maximum(
            jnp.maximum(hbuf[pl.ds(0, Hp, stride=2), :, :],
                        hbuf[pl.ds(1, Hp, stride=2), :, :]),
            hbuf[pl.ds(2, Hp, stride=2), :, :])                         # (Hp, Wp, C)

    pooled = pl.pallas_call(
        bn_relu_pool_kernel,
        out_shape=jax.ShapeDtypeStruct((N, Hp, Wp, Cout), jnp.float32),
        grid=(N,),
        in_specs=[
            pl.BlockSpec((None, Ho, Wo, Cout), lambda n: (n, 0, 0, 0)),
            pl.BlockSpec((1, Cout), lambda n: (0, 0)),
            pl.BlockSpec((1, Cout), lambda n: (0, 0)),
        ],
        out_specs=pl.BlockSpec((None, Hp, Wp, Cout), lambda n: (n, 0, 0, 0)),
        scratch_shapes=[
            pltpu.VMEM((Ho, Wo + 2, Cout), jnp.float32),   # W-padded BN+ReLU result
            pltpu.VMEM((Ho + 2, Wp, Cout), jnp.float32),   # H-padded, W-pooled result
        ],
        compiler_params=pltpu.CompilerParams(dimension_semantics=("parallel",)),
    )(conv4, scale, shift)

    # Module contract is NCHW; only this small pooled tensor is transposed (the input-side
    # NCHW->NHWC transpose was folded into the xw gather above).
    return jnp.transpose(pooled, (0, 3, 1, 2))


def reference_forward(x_nchw, params):
    """Pure-JAX reference replicating the PyTorch module semantics (train-mode BN)."""
    w, b, gamma, beta = params["w"], params["b"], params["gamma"], params["beta"]
    conv = lax.conv_general_dilated(
        x_nchw.astype(jnp.float32), w.astype(jnp.float32),
        window_strides=(2, 2), padding=((3, 3), (3, 3)),
        dimension_numbers=("NCHW", "OIHW", "NCHW"))
    conv = conv + b.reshape(1, -1, 1, 1)
    mean = jnp.mean(conv, axis=(0, 2, 3), keepdims=True)
    var = jnp.mean((conv - mean) ** 2, axis=(0, 2, 3), keepdims=True)
    y = gamma.reshape(1, -1, 1, 1) * (conv - mean) * lax.rsqrt(var + EPS) + beta.reshape(1, -1, 1, 1)
    y = jnp.maximum(y, 0.0)
    yp = jnp.pad(y, ((0, 0), (0, 0), (1, 1), (1, 1)), constant_values=-jnp.inf)
    return lax.reduce_window(yp, -jnp.inf, lax.max, (1, 1, 3, 3), (1, 1, 2, 2), "VALID")


if __name__ == "__main__":
    key = jax.random.PRNGKey(0)
    kx, kw, kb = jax.random.split(key, 3)

    N, Cin, H, W = 2, 3, 16, 16
    Cout, KH = 64, 7

    x = jax.random.normal(kx, (N, Cin, H, W), dtype=jnp.float32)
    params = dict(
        w=jax.random.normal(kw, (Cout, Cin, KH, KH), dtype=jnp.float32) * 0.1,
        b=jax.random.normal(kb, (Cout,), dtype=jnp.float32) * 0.1,
        gamma=jnp.ones((Cout,), jnp.float32),   # BatchNorm2d default weight
        beta=jnp.zeros((Cout,), jnp.float32),   # BatchNorm2d default bias
    )

    out = jax.block_until_ready(input_part_forward(x, params))
    ref = jax.block_until_ready(reference_forward(x, params))

    assert out.shape == (N, Cout, 4, 4), out.shape
    # bf16 MXU operands / bf16 conv stream -> tolerance relaxed vs the f32 reference.
    err = float(np.max(np.abs(np.asarray(out) - np.asarray(ref))))
    assert np.allclose(np.asarray(out), np.asarray(ref), atol=5e-2, rtol=5e-2), err
    print("KERNEL_OK")
</pallas_src>

<mosaic_0001>
module attributes {stable_mosaic.version = 11 : i64} {
  func.func @conv_stats_kernel(%arg0: i32, %arg1: i32, %arg2: memref<1x11x8x21xbf16, #tpu.memory_space<vmem>>, %arg3: memref<1x11x8x21xbf16, #tpu.memory_space<vmem>>, %arg4: memref<147x64xbf16, #tpu.memory_space<vmem>>, %arg5: memref<64x64xbf16, #tpu.memory_space<vmem>>, %arg6: memref<1x2x64xf32, #tpu.memory_space<vmem>>, %arg7: memref<64x147xbf16, #tpu.memory_space<vmem>>) attributes {dimension_semantics = [#tpu.dimension_semantics<parallel>, #tpu.dimension_semantics<arbitrary>], iteration_bounds = array<i64: 2, 1>, scalar_prefetch = 0 : i64, scratch_operands = 1 : i64, tpu.core_type = #tpu.core_type<tc>, window_params = [{transform_indices = @transform_0, window_bounds = array<i64: 1, 11, 8, 21>}, {transform_indices = @transform_1, window_bounds = array<i64: 1, 11, 8, 21>}, {pipeline_mode = #tpu.pipeline_mode<synchronous>, transform_indices = @transform_2, window_bounds = array<i64: 147, 64>}, {transform_indices = @transform_3, window_bounds = array<i64: 64, 64>}, {transform_indices = @transform_4, window_bounds = array<i64: 1, 2, 64>}]} {
    %c8_i32 = arith.constant 8 : i32
    %0 = arith.muli %arg1, %c8_i32 : i32
    %c0_i32 = arith.constant 0 : i32
    %1 = arith.addi %0, %c0_i32 : i32
    %c0_i32_0 = arith.constant 0 : i32
    %2 = arith.addi %1, %c0_i32_0 : i32
    %c0 = arith.constant 0 : index
    %3 = arith.index_cast %2 : i32 to index
    %c0_1 = arith.constant 0 : index
    %c0_2 = arith.constant 0 : index
    %4 = vector.load %arg2[%c0, %3, %c0_1, %c0_2] : memref<1x11x8x21xbf16, #tpu.memory_space<vmem>>, vector<1x1x8x21xbf16>
    %5 = vector.shape_cast %4 : vector<1x1x8x21xbf16> to vector<8x21xbf16>
    %c0_3 = arith.constant 0 : index
    %c0_4 = arith.constant 0 : index
    %6 = vector.load %arg7[%c0_3, %c0_4] : memref<64x147xbf16, #tpu.memory_space<vmem>>, vector<8x21xbf16>
    tpu.vector_store %arg7[%c0_3, %c0_4], %5 {strides = array<i32>} : memref<64x147xbf16, #tpu.memory_space<vmem>>, vector<8x21xbf16>,
    %c1_i32 = arith.constant 1 : i32
    %7 = arith.addi %0, %c1_i32 : i32
    %c0_i32_5 = arith.constant 0 : i32
    %8 = arith.addi %7, %c0_i32_5 : i32
    %c0_6 = arith.constant 0 : index
    %9 = arith.index_cast %8 : i32 to index
    %c0_7 = arith.constant 0 : index
    %c0_8 = arith.constant 0 : index
    %10 = vector.load %arg2[%c0_6, %9, %c0_7, %c0_8] : memref<1x11x8x21xbf16, #tpu.memory_space<vmem>>, vector<1x1x8x21xbf16>
    %11 = vector.shape_cast %10 : vector<1x1x8x21xbf16> to vector<8x21xbf16>
    %c8 = arith.constant 8 : index
    %c0_9 = arith.constant 0 : index
    %12 = vector.load %arg7[%c8, %c0_9] : memref<64x147xbf16, #tpu.memory_space<vmem>>, vector<8x21xbf16>
    tpu.vector_store %arg7[%c8, %c0_9], %11 {strides = array<i32>} : memref<64x147xbf16, #tpu.memory_space<vmem>>, vector<8x21xbf16>,
    %c2_i32 = arith.constant 2 : i32
    %13 = arith.addi %0, %c2_i32 : i32
    %c0_i32_10 = arith.constant 0 : i32
    %14 = arith.addi %13, %c0_i32_10 : i32
    %c0_11 = arith.constant 0 : index
    %15 = arith.index_cast %14 : i32 to index
    %c0_12 = arith.constant 0 : index
    %c0_13 = arith.constant 0 : index
    %16 = vector.load %arg2[%c0_11, %15, %c0_12, %c0_13] : memref<1x11x8x21xbf16, #tpu.memory_space<vmem>>, vector<1x1x8x21xbf16>
    %17 = vector.shape_cast %16 : vector<1x1x8x21xbf16> to vector<8x21xbf16>
    %c16 = arith.constant 16 : index
    %c0_14 = arith.constant 0 : index
    %18 = vector.load %arg7[%c16, %c0_14] : memref<64x147xbf16, #tpu.memory_space<vmem>>, vector<8x21xbf16>
    tpu.vector_store %arg7[%c16, %c0_14], %17 {strides = array<i32>} : memref<64x147xbf16, #tpu.memory_space<vmem>>, vector<8x21xbf16>,
    %c3_i32 = arith.constant 3 : i32
    %19 = arith.addi %0, %c3_i32 : i32
    %c0_i32_15 = arith.constant 0 : i32
    %20 = arith.addi %19, %c0_i32_15 : i32
    %c0_16 = arith.constant 0 : index
    %21 = arith.index_cast %20 : i32 to index
    %c0_17 = arith.constant 0 : index
    %c0_18 = arith.constant 0 : index
    %22 = vector.load %arg2[%c0_16, %21, %c0_17, %c0_18] : memref<1x11x8x21xbf16, #tpu.memory_space<vmem>>, vector<1x1x8x21xbf16>
    %23 = vector.shape_cast %22 : vector<1x1x8x21xbf16> to vector<8x21xbf16>
    %c24 = arith.constant 24 : index
    %c0_19 = arith.constant 0 : index
    %24 = vector.load %arg7[%c24, %c0_19] : memref<64x147xbf16, #tpu.memory_space<vmem>>, vector<8x21xbf16>
    tpu.vector_store %arg7[%c24, %c0_19], %23 {strides = array<i32>} : memref<64x147xbf16, #tpu.memory_space<vmem>>, vector<8x21xbf16>,
    %c4_i32 = arith.constant 4 : i32
    %25 = arith.addi %0, %c4_i32 : i32
    %c0_i32_20 = arith.constant 0 : i32
    %26 = arith.addi %25, %c0_i32_20 : i32
    %c0_21 = arith.constant 0 : index
    %27 = arith.index_cast %26 : i32 to index
    %c0_22 = arith.constant 0 : index
    %c0_23 = arith.constant 0 : index
    %28 = vector.load %arg2[%c0_21, %27, %c0_22, %c0_23] : memref<1x11x8x21xbf16, #tpu.memory_space<vmem>>, vector<1x1x8x21xbf16>
    %29 = vector.shape_cast %28 : vector<1x1x8x21xbf16> to vector<8x21xbf16>
    %c32 = arith.constant 32 : index
    %c0_24 = arith.constant 0 : index
    %30 = vector.load %arg7[%c32, %c0_24] : memref<64x147xbf16, #tpu.memory_space<vmem>>, vector<8x21xbf16>
    tpu.vector_store %arg7[%c32, %c0_24], %29 {strides = array<i32>} : memref<64x147xbf16, #tpu.memory_space<vmem>>, vector<8x21xbf16>,
    %c5_i32 = arith.constant 5 : i32
    %31 = arith.addi %0, %c5_i32 : i32
    %c0_i32_25 = arith.constant 0 : i32
    %32 = arith.addi %31, %c0_i32_25 : i32
    %c0_26 = arith.constant 0 : index
    %33 = arith.index_cast %32 : i32 to index
    %c0_27 = arith.constant 0 : index
    %c0_28 = arith.constant 0 : index
    %34 = vector.load %arg2[%c0_26, %33, %c0_27, %c0_28] : memref<1x11x8x21xbf16, #tpu.memory_space<vmem>>, vector<1x1x8x21xbf16>
    %35 = vector.shape_cast %34 : vector<1x1x8x21xbf16> to vector<8x21xbf16>
    %c40 = arith.constant 40 : index
    %c0_29 = arith.constant 0 : index
    %36 = vector.load %arg7[%c40, %c0_29] : memref<64x147xbf16, #tpu.memory_space<vmem>>, vector<8x21xbf16>
    tpu.vector_store %arg7[%c40, %c0_29], %35 {strides = array<i32>} : memref<64x147xbf16, #tpu.memory_space<vmem>>, vector<8x21xbf16>,
    %c6_i32 = arith.constant 6 : i32
    %37 = arith.addi %0, %c6_i32 : i32
    %c0_i32_30 = arith.constant 0 : i32
    %38 = arith.addi %37, %c0_i32_30 : i32
    %c0_31 = arith.constant 0 : index
    %39 = arith.index_cast %38 : i32 to index
    %c0_32 = arith.constant 0 : index
    %c0_33 = arith.constant 0 : index
    %40 = vector.load %arg2[%c0_31, %39, %c0_32, %c0_33] : memref<1x11x8x21xbf16, #tpu.memory_space<vmem>>, vector<1x1x8x21xbf16>
    %41 = vector.shape_cast %40 : vector<1x1x8x21xbf16> to vector<8x21xbf16>
    %c48 = arith.constant 48 : index
    %c0_34 = arith.constant 0 : index
    %42 = vector.load %arg7[%c48, %c0_34] : memref<64x147xbf16, #tpu.memory_space<vmem>>, vector<8x21xbf16>
    tpu.vector_store %arg7[%c48, %c0_34], %41 {strides = array<i32>} : memref<64x147xbf16, #tpu.memory_space<vmem>>, vector<8x21xbf16>,
    %c7_i32 = arith.constant 7 : i32
    %43 = arith.addi %0, %c7_i32 : i32
    %c0_i32_35 = arith.constant 0 : i32
    %44 = arith.addi %43, %c0_i32_35 : i32
    %c0_36 = arith.constant 0 : index
    %45 = arith.index_cast %44 : i32 to index
    %c0_37 = arith.constant 0 : index
    %c0_38 = arith.constant 0 : index
    %46 = vector.load %arg2[%c0_36, %45, %c0_37, %c0_38] : memref<1x11x8x21xbf16, #tpu.memory_space<vmem>>, vector<1x1x8x21xbf16>
    %47 = vector.shape_cast %46 : vector<1x1x8x21xbf16> to vector<8x21xbf16>
    %c56 = arith.constant 56 : index
    %c0_39 = arith.constant 0 : index
    %48 = vector.load %arg7[%c56, %c0_39] : memref<64x147xbf16, #tpu.memory_space<vmem>>, vector<8x21xbf16>
    tpu.vector_store %arg7[%c56, %c0_39], %47 {strides = array<i32>} : memref<64x147xbf16, #tpu.memory_space<vmem>>, vector<8x21xbf16>,
    %c0_i32_40 = arith.constant 0 : i32
    %49 = arith.addi %0, %c0_i32_40 : i32
    %c0_i32_41 = arith.constant 0 : i32
    %50 = arith.addi %49, %c0_i32_41 : i32
    %c0_42 = arith.constant 0 : index
    %51 = arith.index_cast %50 : i32 to index
    %c0_43 = arith.constant 0 : index
    %c0_44 = arith.constant 0 : index
    %52 = vector.load %arg3[%c0_42, %51, %c0_43, %c0_44] : memref<1x11x8x21xbf16, #tpu.memory_space<vmem>>, vector<1x1x8x21xbf16>
    %53 = vector.shape_cast %52 : vector<1x1x8x21xbf16> to vector<8x21xbf16>
    %c0_45 = arith.constant 0 : index
    %c21 = arith.constant 21 : index
    %54 = vector.load %arg7[%c0_45, %c21] : memref<64x147xbf16, #tpu.memory_space<vmem>>, vector<8x21xbf16>
    tpu.vector_store %arg7[%c0_45, %c21], %53 {strides = array<i32>} : memref<64x147xbf16, #tpu.memory_space<vmem>>, vector<8x21xbf16>,
    %c1_i32_46 = arith.constant 1 : i32
    %55 = arith.addi %0, %c1_i32_46 : i32
    %c0_i32_47 = arith.constant 0 : i32
    %56 = arith.addi %55, %c0_i32_47 : i32
    %c0_48 = arith.constant 0 : index
    %57 = arith.index_cast %56 : i32 to index
    %c0_49 = arith.constant 0 : index
    %c0_50 = arith.constant 0 : index
    %58 = vector.load %arg3[%c0_48, %57, %c0_49, %c0_50] : memref<1x11x8x21xbf16, #tpu.memory_space<vmem>>, vector<1x1x8x21xbf16>
    %59 = vector.shape_cast %58 : vector<1x1x8x21xbf16> to vector<8x21xbf16>
    %c8_51 = arith.constant 8 : index
    %c21_52 = arith.constant 21 : index
    %60 = vector.load %arg7[%c8_51, %c21_52] : memref<64x147xbf16, #tpu.memory_space<vmem>>, vector<8x21xbf16>
    tpu.vector_store %arg7[%c8_51, %c21_52], %59 {strides = array<i32>} : memref<64x147xbf16, #tpu.memory_space<vmem>>, vector<8x21xbf16>,
    %c2_i32_53 = arith.constant 2 : i32
    %61 = arith.addi %0, %c2_i32_53 : i32
    %c0_i32_54 = arith.constant 0 : i32
    %62 = arith.addi %61, %c0_i32_54 : i32
    %c0_55 = arith.constant 0 : index
    %63 = arith.index_cast %62 : i32 to index
    %c0_56 = arith.constant 0 : index
    %c0_57 = arith.constant 0 : index
    %64 = vector.load %arg3[%c0_55, %63, %c0_56, %c0_57] : memref<1x11x8x21xbf16, #tpu.memory_space<vmem>>, vector<1x1x8x21xbf16>
    %65 = vector.shape_cast %64 : vector<1x1x8x21xbf16> to vector<8x21xbf16>
    %c16_58 = arith.constant 16 : index
    %c21_59 = arith.constant 21 : index
    %66 = vector.load %arg7[%c16_58, %c21_59] : memref<64x147xbf16, #tpu.memory_space<vmem>>, vector<8x21xbf16>
    tpu.vector_store %arg7[%c16_58, %c21_59], %65 {strides = array<i32>} : memref<64x147xbf16, #tpu.memory_space<vmem>>, vector<8x21xbf16>,
    %c3_i32_60 = arith.constant 3 : i32
    %67 = arith.addi %0, %c3_i32_60 : i32
    %c0_i32_61 = arith.constant 0 : i32
    %68 = arith.addi %67, %c0_i32_61 : i32
    %c0_62 = arith.constant 0 : index
    %69 = arith.index_cast %68 : i32 to index
    %c0_63 = arith.constant 0 : index
    %c0_64 = arith.constant 0 : index
    %70 = vector.load %arg3[%c0_62, %69, %c0_63, %c0_64] : memref<1x11x8x21xbf16, #tpu.memory_space<vmem>>, vector<1x1x8x21xbf16>
    %71 = vector.shape_cast %70 : vector<1x1x8x21xbf16> to vector<8x21xbf16>
    %c24_65 = arith.constant 24 : index
    %c21_66 = arith.constant 21 : index
    %72 = vector.load %arg7[%c24_65, %c21_66] : memref<64x147xbf16, #tpu.memory_space<vmem>>, vector<8x21xbf16>
    tpu.vector_store %arg7[%c24_65, %c21_66], %71 {strides = array<i32>} : memref<64x147xbf16, #tpu.memory_space<vmem>>, vector<8x21xbf16>,
    %c4_i32_67 = arith.constant 4 : i32
    %73 = arith.addi %0, %c4_i32_67 : i32
    %c0_i32_68 = arith.constant 0 : i32
    %74 = arith.addi %73, %c0_i32_68 : i32
    %c0_69 = arith.constant 0 : index
    %75 = arith.index_cast %74 : i32 to index
    %c0_70 = arith.constant 0 : index
    %c0_71 = arith.constant 0 : index
    %76 = vector.load %arg3[%c0_69, %75, %c0_70, %c0_71] : memref<1x11x8x21xbf16, #tpu.memory_space<vmem>>, vector<1x1x8x21xbf16>
    %77 = vector.shape_cast %76 : vector<1x1x8x21xbf16> to vector<8x21xbf16>
    %c32_72 = arith.constant 32 : index
    %c21_73 = arith.constant 21 : index
    %78 = vector.load %arg7[%c32_72, %c21_73] : memref<64x147xbf16, #tpu.memory_space<vmem>>, vector<8x21xbf16>
    tpu.vector_store %arg7[%c32_72, %c21_73], %77 {strides = array<i32>} : memref<64x147xbf16, #tpu.memory_space<vmem>>, vector<8x21xbf16>,
    %c5_i32_74 = arith.constant 5 : i32
    %79 = arith.addi %0, %c5_i32_74 : i32
    %c0_i32_75 = arith.constant 0 : i32
    %80 = arith.addi %79, %c0_i32_75 : i32
    %c0_76 = arith.constant 0 : index
    %81 = arith.index_cast %80 : i32 to index
    %c0_77 = arith.constant 0 : index
    %c0_78 = arith.constant 0 : index
    %82 = vector.load %arg3[%c0_76, %81, %c0_77, %c0_78] : memref<1x11x8x21xbf16, #tpu.memory_space<vmem>>, vector<1x1x8x21xbf16>
    %83 = vector.shape_cast %82 : vector<1x1x8x21xbf16> to vector<8x21xbf16>
    %c40_79 = arith.constant 40 : index
    %c21_80 = arith.constant 21 : index
    %84 = vector.load %arg7[%c40_79, %c21_80] : memref<64x147xbf16, #tpu.memory_space<vmem>>, vector<8x21xbf16>
    tpu.vector_store %arg7[%c40_79, %c21_80], %83 {strides = array<i32>} : memref<64x147xbf16, #tpu.memory_space<vmem>>, vector<8x21xbf16>,
    %c6_i32_81 = arith.constant 6 : i32
    %85 = arith.addi %0, %c6_i32_81 : i32
    %c0_i32_82 = arith.constant 0 : i32
    %86 = arith.addi %85, %c0_i32_82 : i32
    %c0_83 = arith.constant 0 : index
    %87 = arith.index_cast %86 : i32 to index
    %c0_84 = arith.constant 0 : index
    %c0_85 = arith.constant 0 : index
    %88 = vector.load %arg3[%c0_83, %87, %c0_84, %c0_85] : memref<1x11x8x21xbf16, #tpu.memory_space<vmem>>, vector<1x1x8x21xbf16>
    %89 = vector.shape_cast %88 : vector<1x1x8x21xbf16> to vector<8x21xbf16>
    %c48_86 = arith.constant 48 : index
    %c21_87 = arith.constant 21 : index
    %90 = vector.load %arg7[%c48_86, %c21_87] : memref<64x147xbf16, #tpu.memory_space<vmem>>, vector<8x21xbf16>
    tpu.vector_store %arg7[%c48_86, %c21_87], %89 {strides = array<i32>} : memref<64x147xbf16, #tpu.memory_space<vmem>>, vector<8x21xbf16>,
    %c7_i32_88 = arith.constant 7 : i32
    %91 = arith.addi %0, %c7_i32_88 : i32
    %c0_i32_89 = arith.constant 0 : i32
    %92 = arith.addi %91, %c0_i32_89 : i32
    %c0_90 = arith.constant 0 : index
    %93 = arith.index_cast %92 : i32 to index
    %c0_91 = arith.constant 0 : index
    %c0_92 = arith.constant 0 : index
    %94 = vector.load %arg3[%c0_90, %93, %c0_91, %c0_92] : memref<1x11x8x21xbf16, #tpu.memory_space<vmem>>, vector<1x1x8x21xbf16>
    %95 = vector.shape_cast %94 : vector<1x1x8x21xbf16> to vector<8x21xbf16>
    %c56_93 = arith.constant 56 : index
    %c21_94 = arith.constant 21 : index
    %96 = vector.load %arg7[%c56_93, %c21_94] : memref<64x147xbf16, #tpu.memory_space<vmem>>, vector<8x21xbf16>
    tpu.vector_store %arg7[%c56_93, %c21_94], %95 {strides = array<i32>} : memref<64x147xbf16, #tpu.memory_space<vmem>>, vector<8x21xbf16>,
    %c0_i32_95 = arith.constant 0 : i32
    %97 = arith.addi %0, %c0_i32_95 : i32
    %c1_i32_96 = arith.constant 1 : i32
    %98 = arith.addi %97, %c1_i32_96 : i32
    %c0_97 = arith.constant 0 : index
    %99 = arith.index_cast %98 : i32 to index
    %c0_98 = arith.constant 0 : index
    %c0_99 = arith.constant 0 : index
    %100 = vector.load %arg2[%c0_97, %99, %c0_98, %c0_99] : memref<1x11x8x21xbf16, #tpu.memory_space<vmem>>, vector<1x1x8x21xbf16>
    %101 = vector.shape_cast %100 : vector<1x1x8x21xbf16> to vector<8x21xbf16>
    %c0_100 = arith.constant 0 : index
    %c42 = arith.constant 42 : index
    %102 = vector.load %arg7[%c0_100, %c42] : memref<64x147xbf16, #tpu.memory_space<vmem>>, vector<8x21xbf16>
    tpu.vector_store %arg7[%c0_100, %c42], %101 {strides = array<i32>} : memref<64x147xbf16, #tpu.memory_space<vmem>>, vector<8x21xbf16>,
    %c1_i32_101 = arith.constant 1 : i32
    %103 = arith.addi %0, %c1_i32_101 : i32
    %c1_i32_102 = arith.constant 1 : i32
    %104 = arith.addi %103, %c1_i32_102 : i32
    %c0_103 = arith.constant 0 : index
    %105 = arith.index_cast %104 : i32 to index
    %c0_104 = arith.constant 0 : index
    %c0_105 = arith.constant 0 : index
    %106 = vector.load %arg2[%c0_103, %105, %c0_104, %c0_105] : memref<1x11x8x21xbf16, #tpu.memory_space<vmem>>, vector<1x1x8x21xbf16>
    %107 = vector.shape_cast %106 : vector<1x1x8x21xbf16> to vector<8x21xbf16>
    %c8_106 = arith.constant 8 : index
    %c42_107 = arith.constant 42 : index
    %108 = vector.load %arg7[%c8_106, %c42_107] : memref<64x147xbf16, #tpu.memory_space<vmem>>, vector<8x21xbf16>
    tpu.vector_store %arg7[%c8_106, %c42_107], %107 {strides = array<i32>} : memref<64x147xbf16, #tpu.memory_space<vmem>>, vector<8x21xbf16>,
    %c2_i32_108 = arith.constant 2 : i32
    %109 = arith.addi %0, %c2_i32_108 : i32
    %c1_i32_109 = arith.constant 1 : i32
    %110 = arith.addi %109, %c1_i32_109 : i32
    %c0_110 = arith.constant 0 : index
    %111 = arith.index_cast %110 : i32 to index
    %c0_111 = arith.constant 0 : index
    %c0_112 = arith.constant 0 : index
    %112 = vector.load %arg2[%c0_110, %111, %c0_111, %c0_112] : memref<1x11x8x21xbf16, #tpu.memory_space<vmem>>, vector<1x1x8x21xbf16>
    %113 = vector.shape_cast %112 : vector<1x1x8x21xbf16> to vector<8x21xbf16>
    %c16_113 = arith.constant 16 : index
    %c42_114 = arith.constant 42 : index
    %114 = vector.load %arg7[%c16_113, %c42_114] : memref<64x147xbf16, #tpu.memory_space<vmem>>, vector<8x21xbf16>
    tpu.vector_store %arg7[%c16_113, %c42_114], %113 {strides = array<i32>} : memref<64x147xbf16, #tpu.memory_space<vmem>>, vector<8x21xbf16>,
    %c3_i32_115 = arith.constant 3 : i32
    %115 = arith.addi %0, %c3_i32_115 : i32
    %c1_i32_116 = arith.constant 1 : i32
    %116 = arith.addi %115, %c1_i32_116 : i32
    %c0_117 = arith.constant 0 : index
    %117 = arith.index_cast %116 : i32 to index
    %c0_118 = arith.constant 0 : index
    %c0_119 = arith.constant 0 : index
    %118 = vector.load %arg2[%c0_117, %117, %c0_118, %c0_119] : memref<1x11x8x21xbf16, #tpu.memory_space<vmem>>, vector<1x1x8x21xbf16>
    %119 = vector.shape_cast %118 : vector<1x1x8x21xbf16> to vector<8x21xbf16>
    %c24_120 = arith.constant 24 : index
    %c42_121 = arith.constant 42 : index
    %120 = vector.load %arg7[%c24_120, %c42_121] : memref<64x147xbf16, #tpu.memory_space<vmem>>, vector<8x21xbf16>
    tpu.vector_store %arg7[%c24_120, %c42_121], %119 {strides = array<i32>} : memref<64x147xbf16, #tpu.memory_space<vmem>>, vector<8x21xbf16>,
    %c4_i32_122 = arith.constant 4 : i32
    %121 = arith.addi %0, %c4_i32_122 : i32
    %c1_i32_123 = arith.constant 1 : i32
    %122 = arith.addi %121, %c1_i32_123 : i32
    %c0_124 = arith.constant 0 : index
    %123 = arith.index_cast %122 : i32 to index
    %c0_125 = arith.constant 0 : index
    %c0_126 = arith.constant 0 : index
    %124 = vector.load %arg2[%c0_124, %123, %c0_125, %c0_126] : memref<1x11x8x21xbf16, #tpu.memory_space<vmem>>, vector<1x1x8x21xbf16>
    %125 = vector.shape_cast %124 : vector<1x1x8x21xbf16> to vector<8x21xbf16>
    %c32_127 = arith.constant 32 : index
    %c42_128 = arith.constant 42 : index
    %126 = vector.load %arg7[%c32_127, %c42_128] : memref<64x147xbf16, #tpu.memory_space<vmem>>, vector<8x21xbf16>
    tpu.vector_store %arg7[%c32_127, %c42_128], %125 {strides = array<i32>} : memref<64x147xbf16, #tpu.memory_space<vmem>>, vector<8x21xbf16>,
    %c5_i32_129 = arith.constant 5 : i32
    %127 = arith.addi %0, %c5_i32_129 : i32
    %c1_i32_130 = arith.constant 1 : i32
    %128 = arith.addi %127, %c1_i32_130 : i32
    %c0_131 = arith.constant 0 : index
    %129 = arith.index_cast %128 : i32 to index
    %c0_132 = arith.constant 0 : index
    %c0_133 = arith.constant 0 : index
    %130 = vector.load %arg2[%c0_131, %129, %c0_132, %c0_133] : memref<1x11x8x21xbf16, #tpu.memory_space<vmem>>, vector<1x1x8x21xbf16>
    %131 = vector.shape_cast %130 : vector<1x1x8x21xbf16> to vector<8x21xbf16>
    %c40_134 = arith.constant 40 : index
    %c42_135 = arith.constant 42 : index
    %132 = vector.load %arg7[%c40_134, %c42_135] : memref<64x147xbf16, #tpu.memory_space<vmem>>, vector<8x21xbf16>
    tpu.vector_store %arg7[%c40_134, %c42_135], %131 {strides = array<i32>} : memref<64x147xbf16, #tpu.memory_space<vmem>>, vector<8x21xbf16>,
    %c6_i32_136 = arith.constant 6 : i32
    %133 = arith.addi %0, %c6_i32_136 : i32
    %c1_i32_137 = arith.constant 1 : i32
    %134 = arith.addi %133, %c1_i32_137 : i32
    %c0_138 = arith.constant 0 : index
    %135 = arith.index_cast %134 : i32 to index
    %c0_139 = arith.constant 0 : index
    %c0_140 = arith.constant 0 : index
    %136 = vector.load %arg2[%c0_138, %135, %c0_139, %c0_140] : memref<1x11x8x21xbf16, #tpu.memory_space<vmem>>, vector<1x1x8x21xbf16>
    %137 = vector.shape_cast %136 : vector<1x1x8x21xbf16> to vector<8x21xbf16>
    %c48_141 = arith.constant 48 : index
    %c42_142 = arith.constant 42 : index
    %138 = vector.load %arg7[%c48_141, %c42_142] : memref<64x147xbf16, #tpu.memory_space<vmem>>, vector<8x21xbf16>
    tpu.vector_store %arg7[%c48_141, %c42_142], %137 {strides = array<i32>} : memref<64x147xbf16, #tpu.memory_space<vmem>>, vector<8x21xbf16>,
    %c7_i32_143 = arith.constant 7 : i32
    %139 = arith.addi %0, %c7_i32_143 : i32
    %c1_i32_144 = arith.constant 1 : i32
    %140 = arith.addi %139, %c1_i32_144 : i32
    %c0_145 = arith.constant 0 : index
    %141 = arith.index_cast %140 : i32 to index
    %c0_146 = arith.constant 0 : index
    %c0_147 = arith.constant 0 : index
    %142 = vector.load %arg2[%c0_145, %141, %c0_146, %c0_147] : memref<1x11x8x21xbf16, #tpu.memory_space<vmem>>, vector<1x1x8x21xbf16>
    %143 = vector.shape_cast %142 : vector<1x1x8x21xbf16> to vector<8x21xbf16>
    %c56_148 = arith.constant 56 : index
    %c42_149 = arith.constant 42 : index
    %144 = vector.load %arg7[%c56_148, %c42_149] : memref<64x147xbf16, #tpu.memory_space<vmem>>, vector<8x21xbf16>
    tpu.vector_store %arg7[%c56_148, %c42_149], %143 {strides = array<i32>} : memref<64x147xbf16, #tpu.memory_space<vmem>>, vector<8x21xbf16>,
    %c0_i32_150 = arith.constant 0 : i32
    %145 = arith.addi %0, %c0_i32_150 : i32
    %c1_i32_151 = arith.constant 1 : i32
    %146 = arith.addi %145, %c1_i32_151 : i32
    %c0_152 = arith.constant 0 : index
    %147 = arith.index_cast %146 : i32 to index
    %c0_153 = arith.constant 0 : index
    %c0_154 = arith.constant 0 : index
    %148 = vector.load %arg3[%c0_152, %147, %c0_153, %c0_154] : memref<1x11x8x21xbf16, #tpu.memory_space<vmem>>, vector<1x1x8x21xbf16>
    %149 = vector.shape_cast %148 : vector<1x1x8x21xbf16> to vector<8x21xbf16>
    %c0_155 = arith.constant 0 : index
    %c63 = arith.constant 63 : index
    %150 = vector.load %arg7[%c0_155, %c63] : memref<64x147xbf16, #tpu.memory_space<vmem>>, vector<8x21xbf16>
    tpu.vector_store %arg7[%c0_155, %c63], %149 {strides = array<i32>} : memref<64x147xbf16, #tpu.memory_space<vmem>>, vector<8x21xbf16>,
    %c1_i32_156 = arith.constant 1 : i32
    %151 = arith.addi %0, %c1_i32_156 : i32
    %c1_i32_157 = arith.constant 1 : i32
    %152 = arith.addi %151, %c1_i32_157 : i32
    %c0_158 = arith.constant 0 : index
    %153 = arith.index_cast %152 : i32 to index
    %c0_159 = arith.constant 0 : index
    %c0_160 = arith.constant 0 : index
    %154 = vector.load %arg3[%c0_158, %153, %c0_159, %c0_160] : memref<1x11x8x21xbf16, #tpu.memory_space<vmem>>, vector<1x1x8x21xbf16>
    %155 = vector.shape_cast %154 : vector<1x1x8x21xbf16> to vector<8x21xbf16>
    %c8_161 = arith.constant 8 : index
    %c63_162 = arith.constant 63 : index
    %156 = vector.load %arg7[%c8_161, %c63_162] : memref<64x147xbf16, #tpu.memory_space<vmem>>, vector<8x21xbf16>
    tpu.vector_store %arg7[%c8_161, %c63_162], %155 {strides = array<i32>} : memref<64x147xbf16, #tpu.memory_space<vmem>>, vector<8x21xbf16>,
    %c2_i32_163 = arith.constant 2 : i32
    %157 = arith.addi %0, %c2_i32_163 : i32
    %c1_i32_164 = arith.constant 1 : i32
    %158 = arith.addi %157, %c1_i32_164 : i32
    %c0_165 = arith.constant 0 : index
    %159 = arith.index_cast %158 : i32 to index
    %c0_166 = arith.constant 0 : index
    %c0_167 = arith.constant 0 : index
    %160 = vector.load %arg3[%c0_165, %159, %c0_166, %c0_167] : memref<1x11x8x21xbf16, #tpu.memory_space<vmem>>, vector<1x1x8x21xbf16>
    %161 = vector.shape_cast %160 : vector<1x1x8x21xbf16> to vector<8x21xbf16>
    %c16_168 = arith.constant 16 : index
    %c63_169 = arith.constant 63 : index
    %162 = vector.load %arg7[%c16_168, %c63_169] : memref<64x147xbf16, #tpu.memory_space<vmem>>, vector<8x21xbf16>
    tpu.vector_store %arg7[%c16_168, %c63_169], %161 {strides = array<i32>} : memref<64x147xbf16, #tpu.memory_space<vmem>>, vector<8x21xbf16>,
    %c3_i32_170 = arith.constant 3 : i32
    %163 = arith.addi %0, %c3_i32_170 : i32
    %c1_i32_171 = arith.constant 1 : i32
    %164 = arith.addi %163, %c1_i32_171 : i32
    %c0_172 = arith.constant 0 : index
    %165 = arith.index_cast %164 : i32 to index
    %c0_173 = arith.constant 0 : index
    %c0_174 = arith.constant 0 : index
    %166 = vector.load %arg3[%c0_172, %165, %c0_173, %c0_174] : memref<1x11x8x21xbf16, #tpu.memory_space<vmem>>, vector<1x1x8x21xbf16>
    %167 = vector.shape_cast %166 : vector<1x1x8x21xbf16> to vector<8x21xbf16>
    %c24_175 = arith.constant 24 : index
    %c63_176 = arith.constant 63 : index
    %168 = vector.load %arg7[%c24_175, %c63_176] : memref<64x147xbf16, #tpu.memory_space<vmem>>, vector<8x21xbf16>
    tpu.vector_store %arg7[%c24_175, %c63_176], %167 {strides = array<i32>} : memref<64x147xbf16, #tpu.memory_space<vmem>>, vector<8x21xbf16>,
    %c4_i32_177 = arith.constant 4 : i32
    %169 = arith.addi %0, %c4_i32_177 : i32
    %c1_i32_178 = arith.constant 1 : i32
    %170 = arith.addi %169, %c1_i32_178 : i32
    %c0_179 = arith.constant 0 : index
    %171 = arith.index_cast %170 : i32 to index
    %c0_180 = arith.constant 0 : index
    %c0_181 = arith.constant 0 : index
    %172 = vector.load %arg3[%c0_179, %171, %c0_180, %c0_181] : memref<1x11x8x21xbf16, #tpu.memory_space<vmem>>, vector<1x1x8x21xbf16>
    %173 = vector.shape_cast %172 : vector<1x1x8x21xbf16> to vector<8x21xbf16>
    %c32_182 = arith.constant 32 : index
    %c63_183 = arith.constant 63 : index
    %174 = vector.load %arg7[%c32_182, %c63_183] : memref<64x147xbf16, #tpu.memory_space<vmem>>, vector<8x21xbf16>
    tpu.vector_store %arg7[%c32_182, %c63_183], %173 {strides = array<i32>} : memref<64x147xbf16, #tpu.memory_space<vmem>>, vector<8x21xbf16>,
    %c5_i32_184 = arith.constant 5 : i32
    %175 = arith.addi %0, %c5_i32_184 : i32
    %c1_i32_185 = arith.constant 1 : i32
    %176 = arith.addi %175, %c1_i32_185 : i32
    %c0_186 = arith.constant 0 : index
    %177 = arith.index_cast %176 : i32 to index
    %c0_187 = arith.constant 0 : index
    %c0_188 = arith.constant 0 : index
    %178 = vector.load %arg3[%c0_186, %177, %c0_187, %c0_188] : memref<1x11x8x21xbf16, #tpu.memory_space<vmem>>, vector<1x1x8x21xbf16>
    %179 = vector.shape_cast %178 : vector<1x1x8x21xbf16> to vector<8x21xbf16>
    %c40_189 = arith.constant 40 : index
    %c63_190 = arith.constant 63 : index
    %180 = vector.load %arg7[%c40_189, %c63_190] : memref<64x147xbf16, #tpu.memory_space<vmem>>, vector<8x21xbf16>
    tpu.vector_store %arg7[%c40_189, %c63_190], %179 {strides = array<i32>} : memref<64x147xbf16, #tpu.memory_space<vmem>>, vector<8x21xbf16>,
    %c6_i32_191 = arith.constant 6 : i32
    %181 = arith.addi %0, %c6_i32_191 : i32
    %c1_i32_192 = arith.constant 1 : i32
    %182 = arith.addi %181, %c1_i32_192 : i32
    %c0_193 = arith.constant 0 : index
    %183 = arith.index_cast %182 : i32 to index
    %c0_194 = arith.constant 0 : index
    %c0_195 = arith.constant 0 : index
    %184 = vector.load %arg3[%c0_193, %183, %c0_194, %c0_195] : memref<1x11x8x21xbf16, #tpu.memory_space<vmem>>, vector<1x1x8x21xbf16>
    %185 = vector.shape_cast %184 : vector<1x1x8x21xbf16> to vector<8x21xbf16>
    %c48_196 = arith.constant 48 : index
    %c63_197 = arith.constant 63 : index
    %186 = vector.load %arg7[%c48_196, %c63_197] : memref<64x147xbf16, #tpu.memory_space<vmem>>, vector<8x21xbf16>
    tpu.vector_store %arg7[%c48_196, %c63_197], %185 {strides = array<i32>} : memref<64x147xbf16, #tpu.memory_space<vmem>>, vector<8x21xbf16>,
    %c7_i32_198 = arith.constant 7 : i32
    %187 = arith.addi %0, %c7_i32_198 : i32
    %c1_i32_199 = arith.constant 1 : i32
    %188 = arith.addi %187, %c1_i32_199 : i32
    %c0_200 = arith.constant 0 : index
    %189 = arith.index_cast %188 : i32 to index
    %c0_201 = arith.constant 0 : index
    %c0_202 = arith.constant 0 : index
    %190 = vector.load %arg3[%c0_200, %189, %c0_201, %c0_202] : memref<1x11x8x21xbf16, #tpu.memory_space<vmem>>, vector<1x1x8x21xbf16>
    %191 = vector.shape_cast %190 : vector<1x1x8x21xbf16> to vector<8x21xbf16>
    %c56_203 = arith.constant 56 : index
    %c63_204 = arith.constant 63 : index
    %192 = vector.load %arg7[%c56_203, %c63_204] : memref<64x147xbf16, #tpu.memory_space<vmem>>, vector<8x21xbf16>
    tpu.vector_store %arg7[%c56_203, %c63_204], %191 {strides = array<i32>} : memref<64x147xbf16, #tpu.memory_space<vmem>>, vector<8x21xbf16>,
    %c0_i32_205 = arith.constant 0 : i32
    %193 = arith.addi %0, %c0_i32_205 : i32
    %c2_i32_206 = arith.constant 2 : i32
    %194 = arith.addi %193, %c2_i32_206 : i32
    %c0_207 = arith.constant 0 : index
    %195 = arith.index_cast %194 : i32 to index
    %c0_208 = arith.constant 0 : index
    %c0_209 = arith.constant 0 : index
    %196 = vector.load %arg2[%c0_207, %195, %c0_208, %c0_209] : memref<1x11x8x21xbf16, #tpu.memory_space<vmem>>, vector<1x1x8x21xbf16>
    %197 = vector.shape_cast %196 : vector<1x1x8x21xbf16> to vector<8x21xbf16>
    %c0_210 = arith.constant 0 : index
    %c84 = arith.constant 84 : index
    %198 = vector.load %arg7[%c0_210, %c84] : memref<64x147xbf16, #tpu.memory_space<vmem>>, vector<8x21xbf16>
    tpu.vector_store %arg7[%c0_210, %c84], %197 {strides = array<i32>} : memref<64x147xbf16, #tpu.memory_space<vmem>>, vector<8x21xbf16>,
    %c1_i32_211 = arith.constant 1 : i32
    %199 = arith.addi %0, %c1_i32_211 : i32
    %c2_i32_212 = arith.constant 2 : i32
    %200 = arith.addi %199, %c2_i32_212 : i32
    %c0_213 = arith.constant 0 : index
    %201 = arith.index_cast %200 : i32 to index
    %c0_214 = arith.constant 0 : index
    %c0_215 = arith.constant 0 : index
    %202 = vector.load %arg2[%c0_213, %201, %c0_214, %c0_215] : memref<1x11x8x21xbf16, #tpu.memory_space<vmem>>, vector<1x1x8x21xbf16>
    %203 = vector.shape_cast %202 : vector<1x1x8x21xbf16> to vector<8x21xbf16>
    %c8_216 = arith.constant 8 : index
    %c84_217 = arith.constant 84 : index
    %204 = vector.load %arg7[%c8_216, %c84_217] : memref<64x147xbf16, #tpu.memory_space<vmem>>, vector<8x21xbf16>
    tpu.vector_store %arg7[%c8_216, %c84_217], %203 {strides = array<i32>} : memref<64x147xbf16, #tpu.memory_space<vmem>>, vector<8x21xbf16>,
    %c2_i32_218 = arith.constant 2 : i32
    %205 = arith.addi %0, %c2_i32_218 : i32
    %c2_i32_219 = arith.constant 2 : i32
    %206 = arith.addi %205, %c2_i32_219 : i32
    %c0_220 = arith.constant 0 : index
    %207 = arith.index_cast %206 : i32 to index
    %c0_221 = arith.constant 0 : index
    %c0_222 = arith.constant 0 : index
    %208 = vector.load %arg2[%c0_220, %207, %c0_221, %c0_222] : memref<1x11x8x21xbf16, #tpu.memory_space<vmem>>, vector<1x1x8x21xbf16>
    %209 = vector.shape_cast %208 : vector<1x1x8x21xbf16> to vector<8x21xbf16>
    %c16_223 = arith.constant 16 : index
    %c84_224 = arith.constant 84 : index
    %210 = vector.load %arg7[%c16_223, %c84_224] : memref<64x147xbf16, #tpu.memory_space<vmem>>, vector<8x21xbf16>
    tpu.vector_store %arg7[%c16_223, %c84_224], %209 {strides = array<i32>} : memref<64x147xbf16, #tpu.memory_space<vmem>>, vector<8x21xbf16>,
    %c3_i32_225 = arith.constant 3 : i32
    %211 = arith.addi %0, %c3_i32_225 : i32
    %c2_i32_226 = arith.constant 2 : i32
    %212 = arith.addi %211, %c2_i32_226 : i32
    %c0_227 = arith.constant 0 : index
    %213 = arith.index_cast %212 : i32 to index
    %c0_228 = arith.constant 0 : index
    %c0_229 = arith.constant 0 : index
    %214 = vector.load %arg2[%c0_227, %213, %c0_228, %c0_229] : memref<1x11x8x21xbf16, #tpu.memory_space<vmem>>, vector<1x1x8x21xbf16>
    %215 = vector.shape_cast %214 : vector<1x1x8x21xbf16> to vector<8x21xbf16>
    %c24_230 = arith.constant 24 : index
    %c84_231 = arith.constant 84 : index
    %216 = vector.load %arg7[%c24_230, %c84_231] : memref<64x147xbf16, #tpu.memory_space<vmem>>, vector<8x21xbf16>
    tpu.vector_store %arg7[%c24_230, %c84_231], %215 {strides = array<i32>} : memref<64x147xbf16, #tpu.memory_space<vmem>>, vector<8x21xbf16>,
    %c4_i32_232 = arith.constant 4 : i32
    %217 = arith.addi %0, %c4_i32_232 : i32
    %c2_i32_233 = arith.constant 2 : i32
    %218 = arith.addi %217, %c2_i32_233 : i32
    %c0_234 = arith.constant 0 : index
    %219 = arith.index_cast %218 : i32 to index
    %c0_235 = arith.constant 0 : index
    %c0_236 = arith.constant 0 : index
    %220 = vector.load %arg2[%c0_234, %219, %c0_235, %c0_236] : memref<1x11x8x21xbf16, #tpu.memory_space<vmem>>, vector<1x1x8x21xbf16>
    %221 = vector.shape_cast %220 : vector<1x1x8x21xbf16> to vector<8x21xbf16>
    %c32_237 = arith.constant 32 : index
    %c84_238 = arith.constant 84 : index
    %222 = vector.load %arg7[%c32_237, %c84_238] : memref<64x147xbf16, #tpu.memory_space<vmem>>, vector<8x21xbf16>
    tpu.vector_store %arg7[%c32_237, %c84_238], %221 {strides = array<i32>} : memref<64x147xbf16, #tpu.memory_space<vmem>>, vector<8x21xbf16>,
    %c5_i32_239 = arith.constant 5 : i32
    %223 = arith.addi %0, %c5_i32_239 : i32
    %c2_i32_240 = arith.constant 2 : i32
    %224 = arith.addi %223, %c2_i32_240 : i32
    %c0_241 = arith.constant 0 : index
    %225 = arith.index_cast %224 : i32 to index
    %c0_242 = arith.constant 0 : index
    %c0_243 = arith.constant 0 : index
    %226 = vector.load %arg2[%c0_241, %225, %c0_242, %c0_243] : memref<1x11x8x21xbf16, #tpu.memory_space<vmem>>, vector<1x1x8x21xbf16>
    %227 = vector.shape_cast %226 : vector<1x1x8x21xbf16> to vector<8x21xbf16>
    %c40_244 = arith.constant 40 : index
    %c84_245 = arith.constant 84 : index
    %228 = vector.load %arg7[%c40_244, %c84_245] : memref<64x147xbf16, #tpu.memory_space<vmem>>, vector<8x21xbf16>
    tpu.vector_store %arg7[%c40_244, %c84_245], %227 {strides = array<i32>} : memref<64x147xbf16, #tpu.memory_space<vmem>>, vector<8x21xbf16>,
    %c6_i32_246 = arith.constant 6 : i32
    %229 = arith.addi %0, %c6_i32_246 : i32
    %c2_i32_247 = arith.constant 2 : i32
    %230 = arith.addi %229, %c2_i32_247 : i32
    %c0_248 = arith.constant 0 : index
    %231 = arith.index_cast %230 : i32 to index
    %c0_249 = arith.constant 0 : index
    %c0_250 = arith.constant 0 : index
    %232 = vector.load %arg2[%c0_248, %231, %c0_249, %c0_250] : memref<1x11x8x21xbf16, #tpu.memory_space<vmem>>, vector<1x1x8x21xbf16>
    %233 = vector.shape_cast %232 : vector<1x1x8x21xbf16> to vector<8x21xbf16>
    %c48_251 = arith.constant 48 : index
    %c84_252 = arith.constant 84 : index
    %234 = vector.load %arg7[%c48_251, %c84_252] : memref<64x147xbf16, #tpu.memory_space<vmem>>, vector<8x21xbf16>
    tpu.vector_store %arg7[%c48_251, %c84_252], %233 {strides = array<i32>} : memref<64x147xbf16, #tpu.memory_space<vmem>>, vector<8x21xbf16>,
    %c7_i32_253 = arith.constant 7 : i32
    %235 = arith.addi %0, %c7_i32_253 : i32
    %c2_i32_254 = arith.constant 2 : i32
    %236 = arith.addi %235, %c2_i32_254 : i32
    %c0_255 = arith.constant 0 : index
    %237 = arith.index_cast %236 : i32 to index
    %c0_256 = arith.constant 0 : index
    %c0_257 = arith.constant 0 : index
    %238 = vector.load %arg2[%c0_255, %237, %c0_256, %c0_257] : memref<1x11x8x21xbf16, #tpu.memory_space<vmem>>, vector<1x1x8x21xbf16>
    %239 = vector.shape_cast %238 : vector<1x1x8x21xbf16> to vector<8x21xbf16>
    %c56_258 = arith.constant 56 : index
    %c84_259 = arith.constant 84 : index
    %240 = vector.load %arg7[%c56_258, %c84_259] : memref<64x147xbf16, #tpu.memory_space<vmem>>, vector<8x21xbf16>
    tpu.vector_store %arg7[%c56_258, %c84_259], %239 {strides = array<i32>} : memref<64x147xbf16, #tpu.memory_space<vmem>>, vector<8x21xbf16>,
    %c0_i32_260 = arith.constant 0 : i32
    %241 = arith.addi %0, %c0_i32_260 : i32
    %c2_i32_261 = arith.constant 2 : i32
    %242 = arith.addi %241, %c2_i32_261 : i32
    %c0_262 = arith.constant 0 : index
    %243 = arith.index_cast %242 : i32 to index
    %c0_263 = arith.constant 0 : index
    %c0_264 = arith.constant 0 : index
    %244 = vector.load %arg3[%c0_262, %243, %c0_263, %c0_264] : memref<1x11x8x21xbf16, #tpu.memory_space<vmem>>, vector<1x1x8x21xbf16>
    %245 = vector.shape_cast %244 : vector<1x1x8x21xbf16> to vector<8x21xbf16>
    %c0_265 = arith.constant 0 : index
    %c105 = arith.constant 105 : index
    %246 = vector.load %arg7[%c0_265, %c105] : memref<64x147xbf16, #tpu.memory_space<vmem>>, vector<8x21xbf16>
    tpu.vector_store %arg7[%c0_265, %c105], %245 {strides = array<i32>} : memref<64x147xbf16, #tpu.memory_space<vmem>>, vector<8x21xbf16>,
    %c1_i32_266 = arith.constant 1 : i32
    %247 = arith.addi %0, %c1_i32_266 : i32
    %c2_i32_267 = arith.constant 2 : i32
    %248 = arith.addi %247, %c2_i32_267 : i32
    %c0_268 = arith.constant 0 : index
    %249 = arith.index_cast %248 : i32 to index
    %c0_269 = arith.constant 0 : index
    %c0_270 = arith.constant 0 : index
    %250 = vector.load %arg3[%c0_268, %249, %c0_269, %c0_270] : memref<1x11x8x21xbf16, #tpu.memory_space<vmem>>, vector<1x1x8x21xbf16>
    %251 = vector.shape_cast %250 : vector<1x1x8x21xbf16> to vector<8x21xbf16>
    %c8_271 = arith.constant 8 : index
    %c105_272 = arith.constant 105 : index
    %252 = vector.load %arg7[%c8_271, %c105_272] : memref<64x147xbf16, #tpu.memory_space<vmem>>, vector<8x21xbf16>
    tpu.vector_store %arg7[%c8_271, %c105_272], %251 {strides = array<i32>} : memref<64x147xbf16, #tpu.memory_space<vmem>>, vector<8x21xbf16>,
    %c2_i32_273 = arith.constant 2 : i32
    %253 = arith.addi %0, %c2_i32_273 : i32
    %c2_i32_274 = arith.constant 2 : i32
    %254 = arith.addi %253, %c2_i32_274 : i32
    %c0_275 = arith.constant 0 : index
    %255 = arith.index_cast %254 : i32 to index
    %c0_276 = arith.constant 0 : index
    %c0_277 = arith.constant 0 : index
    %256 = vector.load %arg3[%c0_275, %255, %c0_276, %c0_277] : memref<1x11x8x21xbf16, #tpu.memory_space<vmem>>, vector<1x1x8x21xbf16>
    %257 = vector.shape_cast %256 : vector<1x1x8x21xbf16> to vector<8x21xbf16>
    %c16_278 = arith.constant 16 : index
    %c105_279 = arith.constant 105 : index
    %258 = vector.load %arg7[%c16_278, %c105_279] : memref<64x147xbf16, #tpu.memory_space<vmem>>, vector<8x21xbf16>
    tpu.vector_store %arg7[%c16_278, %c105_279], %257 {strides = array<i32>} : memref<64x147xbf16, #tpu.memory_space<vmem>>, vector<8x21xbf16>,
    %c3_i32_280 = arith.constant 3 : i32
    %259 = arith.addi %0, %c3_i32_280 : i32
    %c2_i32_281 = arith.constant 2 : i32
    %260 = arith.addi %259, %c2_i32_281 : i32
    %c0_282 = arith.constant 0 : index
    %261 = arith.index_cast %260 : i32 to index
    %c0_283 = arith.constant 0 : index
    %c0_284 = arith.constant 0 : index
    %262 = vector.load %arg3[%c0_282, %261, %c0_283, %c0_284] : memref<1x11x8x21xbf16, #tpu.memory_space<vmem>>, vector<1x1x8x21xbf16>
    %263 = vector.shape_cast %262 : vector<1x1x8x21xbf16> to vector<8x21xbf16>
    %c24_285 = arith.constant 24 : index
    %c105_286 = arith.constant 105 : index
    %264 = vector.load %arg7[%c24_285, %c105_286] : memref<64x147xbf16, #tpu.memory_space<vmem>>, vector<8x21xbf16>
    tpu.vector_store %arg7[%c24_285, %c105_286], %263 {strides = array<i32>} : memref<64x147xbf16, #tpu.memory_space<vmem>>, vector<8x21xbf16>,
    %c4_i32_287 = arith.constant 4 : i32
    %265 = arith.addi %0, %c4_i32_287 : i32
    %c2_i32_288 = arith.constant 2 : i32
    %266 = arith.addi %265, %c2_i32_288 : i32
    %c0_289 = arith.constant 0 : index
    %267 = arith.index_cast %266 : i32 to index
    %c0_290 = arith.constant 0 : index
    %c0_291 = arith.constant 0 : index
    %268 = vector.load %arg3[%c0_289, %267, %c0_290, %c0_291] : memref<1x11x8x21xbf16, #tpu.memory_space<vmem>>, vector<1x1x8x21xbf16>
    %269 = vector.shape_cast %268 : vector<1x1x8x21xbf16> to vector<8x21xbf16>
    %c32_292 = arith.constant 32 : index
    %c105_293 = arith.constant 105 : index
    %270 = vector.load %arg7[%c32_292, %c105_293] : memref<64x147xbf16, #tpu.memory_space<vmem>>, vector<8x21xbf16>
    tpu.vector_store %arg7[%c32_292, %c105_293], %269 {strides = array<i32>} : memref<64x147xbf16, #tpu.memory_space<vmem>>, vector<8x21xbf16>,
    %c5_i32_294 = arith.constant 5 : i32
    %271 = arith.addi %0, %c5_i32_294 : i32
    %c2_i32_295 = arith.constant 2 : i32
    %272 = arith.addi %271, %c2_i32_295 : i32
    %c0_296 = arith.constant 0 : index
    %273 = arith.index_cast %272 : i32 to index
    %c0_297 = arith.constant 0 : index
    %c0_298 = arith.constant 0 : index
    %274 = vector.load %arg3[%c0_296, %273, %c0_297, %c0_298] : memref<1x11x8x21xbf16, #tpu.memory_space<vmem>>, vector<1x1x8x21xbf16>
    %275 = vector.shape_cast %274 : vector<1x1x8x21xbf16> to vector<8x21xbf16>
    %c40_299 = arith.constant 40 : index
    %c105_300 = arith.constant 105 : index
    %276 = vector.load %arg7[%c40_299, %c105_300] : memref<64x147xbf16, #tpu.memory_space<vmem>>, vector<8x21xbf16>
    tpu.vector_store %arg7[%c40_299, %c105_300], %275 {strides = array<i32>} : memref<64x147xbf16, #tpu.memory_space<vmem>>, vector<8x21xbf16>,
    %c6_i32_301 = arith.constant 6 : i32
    %277 = arith.addi %0, %c6_i32_301 : i32
    %c2_i32_302 = arith.constant 2 : i32
    %278 = arith.addi %277, %c2_i32_302 : i32
    %c0_303 = arith.constant 0 : index
    %279 = arith.index_cast %278 : i32 to index
    %c0_304 = arith.constant 0 : index
    %c0_305 = arith.constant 0 : index
    %280 = vector.load %arg3[%c0_303, %279, %c0_304, %c0_305] : memref<1x11x8x21xbf16, #tpu.memory_space<vmem>>, vector<1x1x8x21xbf16>
    %281 = vector.shape_cast %280 : vector<1x1x8x21xbf16> to vector<8x21xbf16>
    %c48_306 = arith.constant 48 : index
    %c105_307 = arith.constant 105 : index
    %282 = vector.load %arg7[%c48_306, %c105_307] : memref<64x147xbf16, #tpu.memory_space<vmem>>, vector<8x21xbf16>
    tpu.vector_store %arg7[%c48_306, %c105_307], %281 {strides = array<i32>} : memref<64x147xbf16, #tpu.memory_space<vmem>>, vector<8x21xbf16>,
    %c7_i32_308 = arith.constant 7 : i32
    %283 = arith.addi %0, %c7_i32_308 : i32
    %c2_i32_309 = arith.constant 2 : i32
    %284 = arith.addi %283, %c2_i32_309 : i32
    %c0_310 = arith.constant 0 : index
    %285 = arith.index_cast %284 : i32 to index
    %c0_311 = arith.constant 0 : index
    %c0_312 = arith.constant 0 : index
    %286 = vector.load %arg3[%c0_310, %285, %c0_311, %c0_312] : memref<1x11x8x21xbf16, #tpu.memory_space<vmem>>, vector<1x1x8x21xbf16>
    %287 = vector.shape_cast %286 : vector<1x1x8x21xbf16> to vector<8x21xbf16>
    %c56_313 = arith.constant 56 : index
    %c105_314 = arith.constant 105 : index
    %288 = vector.load %arg7[%c56_313, %c105_314] : memref<64x147xbf16, #tpu.memory_space<vmem>>, vector<8x21xbf16>
    tpu.vector_store %arg7[%c56_313, %c105_314], %287 {strides = array<i32>} : memref<64x147xbf16, #tpu.memory_space<vmem>>, vector<8x21xbf16>,
    %c0_i32_315 = arith.constant 0 : i32
    %289 = arith.addi %0, %c0_i32_315 : i32
    %c3_i32_316 = arith.constant 3 : i32
    %290 = arith.addi %289, %c3_i32_316 : i32
    %c0_317 = arith.constant 0 : index
    %291 = arith.index_cast %290 : i32 to index
    %c0_318 = arith.constant 0 : index
    %c0_319 = arith.constant 0 : index
    %292 = vector.load %arg2[%c0_317, %291, %c0_318, %c0_319] : memref<1x11x8x21xbf16, #tpu.memory_space<vmem>>, vector<1x1x8x21xbf16>
    %293 = vector.shape_cast %292 : vector<1x1x8x21xbf16> to vector<8x21xbf16>
    %c0_320 = arith.constant 0 : index
    %c126 = arith.constant 126 : index
    %294 = vector.load %arg7[%c0_320, %c126] : memref<64x147xbf16, #tpu.memory_space<vmem>>, vector<8x21xbf16>
    tpu.vector_store %arg7[%c0_320, %c126], %293 {strides = array<i32>} : memref<64x147xbf16, #tpu.memory_space<vmem>>, vector<8x21xbf16>,
    %c1_i32_321 = arith.constant 1 : i32
    %295 = arith.addi %0, %c1_i32_321 : i32
    %c3_i32_322 = arith.constant 3 : i32
    %296 = arith.addi %295, %c3_i32_322 : i32
    %c0_323 = arith.constant 0 : index
    %297 = arith.index_cast %296 : i32 to index
    %c0_324 = arith.constant 0 : index
    %c0_325 = arith.constant 0 : index
    %298 = vector.load %arg2[%c0_323, %297, %c0_324, %c0_325] : memref<1x11x8x21xbf16, #tpu.memory_space<vmem>>, vector<1x1x8x21xbf16>
    %299 = vector.shape_cast %298 : vector<1x1x8x21xbf16> to vector<8x21xbf16>
    %c8_326 = arith.constant 8 : index
    %c126_327 = arith.constant 126 : index
    %300 = vector.load %arg7[%c8_326, %c126_327] : memref<64x147xbf16, #tpu.memory_space<vmem>>, vector<8x21xbf16>
    tpu.vector_store %arg7[%c8_326, %c126_327], %299 {strides = array<i32>} : memref<64x147xbf16, #tpu.memory_space<vmem>>, vector<8x21xbf16>,
    %c2_i32_328 = arith.constant 2 : i32
    %301 = arith.addi %0, %c2_i32_328 : i32
    %c3_i32_329 = arith.constant 3 : i32
    %302 = arith.addi %301, %c3_i32_329 : i32
    %c0_330 = arith.constant 0 : index
    %303 = arith.index_cast %302 : i32 to index
    %c0_331 = arith.constant 0 : index
    %c0_332 = arith.constant 0 : index
    %304 = vector.load %arg2[%c0_330, %303, %c0_331, %c0_332] : memref<1x11x8x21xbf16, #tpu.memory_space<vmem>>, vector<1x1x8x21xbf16>
    %305 = vector.shape_cast %304 : vector<1x1x8x21xbf16> to vector<8x21xbf16>
    %c16_333 = arith.constant 16 : index
    %c126_334 = arith.constant 126 : index
    %306 = vector.load %arg7[%c16_333, %c126_334] : memref<64x147xbf16, #tpu.memory_space<vmem>>, vector<8x21xbf16>
    tpu.vector_store %arg7[%c16_333, %c126_334], %305 {strides = array<i32>} : memref<64x147xbf16, #tpu.memory_space<vmem>>, vector<8x21xbf16>,
    %c3_i32_335 = arith.constant 3 : i32
    %307 = arith.addi %0, %c3_i32_335 : i32
    %c3_i32_336 = arith.constant 3 : i32
    %308 = arith.addi %307, %c3_i32_336 : i32
    %c0_337 = arith.constant 0 : index
    %309 = arith.index_cast %308 : i32 to index
    %c0_338 = arith.constant 0 : index
    %c0_339 = arith.constant 0 : index
    %310 = vector.load %arg2[%c0_337, %309, %c0_338, %c0_339] : memref<1x11x8x21xbf16, #tpu.memory_space<vmem>>, vector<1x1x8x21xbf16>
    %311 = vector.shape_cast %310 : vector<1x1x8x21xbf16> to vector<8x21xbf16>
    %c24_340 = arith.constant 24 : index
    %c126_341 = arith.constant 126 : index
    %312 = vector.load %arg7[%c24_340, %c126_341] : memref<64x147xbf16, #tpu.memory_space<vmem>>, vector<8x21xbf16>
    tpu.vector_store %arg7[%c24_340, %c126_341], %311 {strides = array<i32>} : memref<64x147xbf16, #tpu.memory_space<vmem>>, vector<8x21xbf16>,
    %c4_i32_342 = arith.constant 4 : i32
    %313 = arith.addi %0, %c4_i32_342 : i32
    %c3_i32_343 = arith.constant 3 : i32
    %314 = arith.addi %313, %c3_i32_343 : i32
    %c0_344 = arith.constant 0 : index
    %315 = arith.index_cast %314 : i32 to index
    %c0_345 = arith.constant 0 : index
    %c0_346 = arith.constant 0 : index
    %316 = vector.load %arg2[%c0_344, %315, %c0_345, %c0_346] : memref<1x11x8x21xbf16, #tpu.memory_space<vmem>>, vector<1x1x8x21xbf16>
    %317 = vector.shape_cast %316 : vector<1x1x8x21xbf16> to vector<8x21xbf16>
    %c32_347 = arith.constant 32 : index
    %c126_348 = arith.constant 126 : index
    %318 = vector.load %arg7[%c32_347, %c126_348] : memref<64x147xbf16, #tpu.memory_space<vmem>>, vector<8x21xbf16>
    tpu.vector_store %arg7[%c32_347, %c126_348], %317 {strides = array<i32>} : memref<64x147xbf16, #tpu.memory_space<vmem>>, vector<8x21xbf16>,
    %c5_i32_349 = arith.constant 5 : i32
    %319 = arith.addi %0, %c5_i32_349 : i32
    %c3_i32_350 = arith.constant 3 : i32
    %320 = arith.addi %319, %c3_i32_350 : i32
    %c0_351 = arith.constant 0 : index
    %321 = arith.index_cast %320 : i32 to index
    %c0_352 = arith.constant 0 : index
    %c0_353 = arith.constant 0 : index
    %322 = vector.load %arg2[%c0_351, %321, %c0_352, %c0_353] : memref<1x11x8x21xbf16, #tpu.memory_space<vmem>>, vector<1x1x8x21xbf16>
    %323 = vector.shape_cast %322 : vector<1x1x8x21xbf16> to vector<8x21xbf16>
    %c40_354 = arith.constant 40 : index
    %c126_355 = arith.constant 126 : index
    %324 = vector.load %arg7[%c40_354, %c126_355] : memref<64x147xbf16, #tpu.memory_space<vmem>>, vector<8x21xbf16>
    tpu.vector_store %arg7[%c40_354, %c126_355], %323 {strides = array<i32>} : memref<64x147xbf16, #tpu.memory_space<vmem>>, vector<8x21xbf16>,
    %c6_i32_356 = arith.constant 6 : i32
    %325 = arith.addi %0, %c6_i32_356 : i32
    %c3_i32_357 = arith.constant 3 : i32
    %326 = arith.addi %325, %c3_i32_357 : i32
    %c0_358 = arith.constant 0 : index
    %327 = arith.index_cast %326 : i32 to index
    %c0_359 = arith.constant 0 : index
    %c0_360 = arith.constant 0 : index
    %328 = vector.load %arg2[%c0_358, %327, %c0_359, %c0_360] : memref<1x11x8x21xbf16, #tpu.memory_space<vmem>>, vector<1x1x8x21xbf16>
    %329 = vector.shape_cast %328 : vector<1x1x8x21xbf16> to vector<8x21xbf16>
    %c48_361 = arith.constant 48 : index
    %c126_362 = arith.constant 126 : index
    %330 = vector.load %arg7[%c48_361, %c126_362] : memref<64x147xbf16, #tpu.memory_space<vmem>>, vector<8x21xbf16>
    tpu.vector_store %arg7[%c48_361, %c126_362], %329 {strides = array<i32>} : memref<64x147xbf16, #tpu.memory_space<vmem>>, vector<8x21xbf16>,
    %c7_i32_363 = arith.constant 7 : i32
    %331 = arith.addi %0, %c7_i32_363 : i32
    %c3_i32_364 = arith.constant 3 : i32
    %332 = arith.addi %331, %c3_i32_364 : i32
    %c0_365 = arith.constant 0 : index
    %333 = arith.index_cast %332 : i32 to index
    %c0_366 = arith.constant 0 : index
    %c0_367 = arith.constant 0 : index
    %334 = vector.load %arg2[%c0_365, %333, %c0_366, %c0_367] : memref<1x11x8x21xbf16, #tpu.memory_space<vmem>>, vector<1x1x8x21xbf16>
    %335 = vector.shape_cast %334 : vector<1x1x8x21xbf16> to vector<8x21xbf16>
    %c56_368 = arith.constant 56 : index
    %c126_369 = arith.constant 126 : index
    %336 = vector.load %arg7[%c56_368, %c126_369] : memref<64x147xbf16, #tpu.memory_space<vmem>>, vector<8x21xbf16>
    tpu.vector_store %arg7[%c56_368, %c126_369], %335 {strides = array<i32>} : memref<64x147xbf16, #tpu.memory_space<vmem>>, vector<8x21xbf16>,
    %c0_370 = arith.constant 0 : index
    %c0_371 = arith.constant 0 : index
    %337 = vector.load %arg7[%c0_370, %c0_371] : memref<64x147xbf16, #tpu.memory_space<vmem>>, vector<64x147xbf16>
    %c0_372 = arith.constant 0 : index
    %c0_373 = arith.constant 0 : index
    %338 = vector.load %arg4[%c0_372, %c0_373] : memref<147x64xbf16, #tpu.memory_space<vmem>>, vector<147x64xbf16>
    %cst = arith.constant dense<0.000000e+00> : vector<64x64xf32>
    %339 = tpu.matmul %337, %338, %cst {dimension_numbers = #tpu.dot_dimension_numbers<[1], [0], [0], [1], [0, 0, 1, 1], [], []>} : vector<64x147xbf16>, vector<147x64xbf16>, vector<64x64xf32> -> vector<64x64xf32>
    %340 = arith.truncf %339 : vector<64x64xf32> to vector<64x64xbf16>
    %c0_374 = arith.constant 0 : index
    %c0_375 = arith.constant 0 : index
    %341 = vector.load %arg5[%c0_374, %c0_375] : memref<64x64xbf16, #tpu.memory_space<vmem>>, vector<64x64xbf16>
    tpu.vector_store %arg5[%c0_374, %c0_375], %340 {strides = array<i32>} : memref<64x64xbf16, #tpu.memory_space<vmem>>, vector<64x64xbf16>,
    %cst_376 = arith.constant dense<0.000000e+00> : vector<64xf32>
    %342 = vector.multi_reduction <add>, %339, %cst_376 [0] : vector<64x64xf32> to vector<64xf32>
    %343 = vector.shape_cast %342 : vector<64xf32> to vector<1x64xf32>
    %c0_377 = arith.constant 0 : index
    %c0_378 = arith.constant 0 : index
    %c0_379 = arith.constant 0 : index
    %344 = vector.load %arg6[%c0_377, %c0_378, %c0_379] : memref<1x2x64xf32, #tpu.memory_space<vmem>>, vector<1x1x64xf32>
    %345 = vector.shape_cast %344 : vector<1x1x64xf32> to vector<1x64xf32>
    %346 = vector.shape_cast %343 : vector<1x64xf32> to vector<1x1x64xf32>
    tpu.vector_store %arg6[%c0_377, %c0_378, %c0_379], %346 {strides = array<i32>} : memref<1x2x64xf32, #tpu.memory_space<vmem>>, vector<1x1x64xf32>,
    %347 = arith.mulf %339, %339 : vector<64x64xf32>
    %cst_380 = arith.constant dense<0.000000e+00> : vector<64xf32>
    %348 = vector.multi_reduction <add>, %347, %cst_380 [0] : vector<64x64xf32> to vector<64xf32>
    %349 = vector.shape_cast %348 : vector<64xf32> to vector<1x64xf32>
    %c0_381 = arith.constant 0 : index
    %c1 = arith.constant 1 : index
    %c0_382 = arith.constant 0 : index
    %350 = vector.load %arg6[%c0_381, %c1, %c0_382] : memref<1x2x64xf32, #tpu.memory_space<vmem>>, vector<1x1x64xf32>
    %351 = vector.shape_cast %350 : vector<1x1x64xf32> to vector<1x64xf32>
    %352 = vector.shape_cast %349 : vector<1x64xf32> to vector<1x1x64xf32>
    tpu.vector_store %arg6[%c0_381, %c1, %c0_382], %352 {strides = array<i32>} : memref<1x2x64xf32, #tpu.memory_space<vmem>>, vector<1x1x64xf32>,
    return
  }
  func.func @transform_0(%arg0: i32, %arg1: i32) -> (i32, i32, i32, i32) {
    %c0_i32 = arith.constant 0 : i32
    %c0_i32_0 = arith.constant 0 : i32
    %c0_i32_1 = arith.constant 0 : i32
    %c0_i32_2 = arith.constant 0 : i32
    return %arg0, %c0_i32, %c0_i32_0, %c0_i32_1 : i32, i32, i32, i32
  }
  func.func @transform_1(%arg0: i32, %arg1: i32) -> (i32, i32, i32, i32) {
    %c0_i32 = arith.constant 0 : i32
    %c0_i32_0 = arith.constant 0 : i32
    %c0_i32_1 = arith.constant 0 : i32
    %c0_i32_2 = arith.constant 0 : i32
    return %arg0, %c0_i32, %c0_i32_0, %c0_i32_1 : i32, i32, i32, i32
  }
  func.func @transform_2(%arg0: i32, %arg1: i32) -> (i32, i32) {
    %c0_i32 = arith.constant 0 : i32
    %c0_i32_0 = arith.constant 0 : i32
    %c0_i32_1 = arith.constant 0 : i32
    return %c0_i32, %c0_i32_0 : i32, i32
  }
  func.func @transform_3(%arg0: i32, %arg1: i32) -> (i32, i32) {
    %c1_i32 = arith.constant 1 : i32
    %0 = arith.muli %arg0, %c1_i32 : i32
    %1 = arith.addi %0, %arg1 : i32
    %c0_i32 = arith.constant 0 : i32
    %c0_i32_0 = arith.constant 0 : i32
    return %1, %c0_i32 : i32, i32
  }
  func.func @transform_4(%arg0: i32, %arg1: i32) -> (i32, i32, i32) {
    %c1_i32 = arith.constant 1 : i32
    %0 = arith.muli %arg0, %c1_i32 : i32
    %1 = arith.addi %0, %arg1 : i32
    %c0_i32 = arith.constant 0 : i32
    %c0_i32_0 = arith.constant 0 : i32
    %c0_i32_1 = arith.constant 0 : i32
    return %1, %c0_i32, %c0_i32_0 : i32, i32, i32
  }
}

</mosaic_0001>

<llo_original>
// kernel: tpu_custom_call.1
$region0: #{tpu_custom_call.1}
  #allocation0 [shape = 'u32[]', space=smem, size = 0x4, offset = 0x4, fixed_abs, tag = 'smem constant byte address 0x4 - core index']
  #allocation1 [shape = 'u32[72,128]{1,0:T(1,128)}', space=vmem, size = 0x9000, scoped, tag = 'internal scratch']
  #allocation2 [shape = 'bf16[64,147]{1,0:T(8,128)(2,1)}', space=vmem, size = 0x8000, scoped, tag = 'scratch operand']
  %s0 = inlined_call_operand.vmem [shape: bf16[2,11,8,21], index: 0, kind: input, shape index: {}]
  %s1 = inlined_call_operand.hbm [shape: bf16[2,11,8,21], index: 1, kind: input, shape index: {}]
  %s2 = inlined_call_operand.vmem [shape: bf16[147,64], index: 2, kind: input, shape index: {}]
  %s3 = inlined_call_operand.vmem [shape: bf16[128,64], index: 3, kind: output, shape index: {0}]
  %s4 = inlined_call_operand.hbm [shape: f32[2,2,64], index: 4, kind: output, shape index: {1}]
  %5 = xla_tuple %s3, %s4
  %s6 = sld [smem:[#allocation0]]
  $region57: #{tpu_custom_call.1} parent=0
    _
  %s8 = ssub.s32 1, %s6
  %s9 = scalar_select 0, %s8, %s6
  $region1: #{tpu_custom_call.1} parent=0
    #allocation3 [shape = 'u8[45056]{0}', space=vmem, size = 0xb000, scoped, tag = 'input window, operand 1']
    #allocation4 [shape = 's32[2]{0}', space=sflag, size = 0x8, scoped, tag = 'scoped memory for tpu_custom_call.1']
    #allocation5 [shape = 's32[2]{0}', space=sflag, size = 0x8, scoped, tag = 'scoped memory for tpu_custom_call.1']
    #allocation6 [shape = 'u8[2048]{0}', space=vmem, size = 0x800, scoped, tag = 'output window, operand 1']
    %10 = vsyncpa [#allocation4], 0
    %s11 = scalar_lea.sflag [#allocation4], 1
    %12 = vsyncpa %s11, 0
    %13 = vsyncpa [#allocation5], 0
    %s14 = scalar_lea.sflag [#allocation5], 1
    %15 = vsyncpa %s14, 0
    loop: start=0, step=1, limit=4
    $region2: #{tpu_custom_call.1} parent=1 // loop_pre_header
      _
    $region3: #{tpu_custom_call.1} parent=1 // loop_header
      %s17 = sphi 0, %s21
      %p18 = scmp.ge.s32.totalorder %s17, 4
      %s24 = sphi 0, %s36
      %s25 = sphi 0, %s32
      %s26 = sphi 0, %s24
      %s27 = sphi 0, %s25
      %s28 = sphi 0, %s26
      %s29 = sphi 0, %s27
      %s39 = sphi 0, %s41
      %s42 = sphi 0, %s39
      %s43 = sphi 0, %s42
      %s59 = sphi 0, %s43
      %s65 = sphi 0, %s67
      %s68 = sphi 0, %s65
      %s69 = sphi 0, %s68
      %s85 = sphi 0, %s69
      %s89 = sphi 0, %s89
      %s91 = sphi 0, %s89
      %s92 = sphi 0, %s91
      %s106 = sphi 0, %s92
      %s114 = sphi 0, %s116
      %s117 = sphi 0, %s114
      %s118 = sphi 0, %s117
      %s134 = sphi 0, %s118
      %s142 = sphi 0, %s144
      %s145 = sphi 0, %s142
      %s146 = sphi 0, %s145
      %s162 = sphi 0, %s146
    $region4: #{tpu_custom_call.1} parent=1 // loop_header_branch
      %20 = sbr.rel (%p18) target = $region8
    $region5: #{tpu_custom_call.1} parent=1 // loop_body
      %s22 = ssub.s32 %s17, 1
      %s23 = ssub.s32 %s17, 2
      %s30 = sadd.s32 1, %s25
      %p31 = scmp.ge.s32.totalorder %s30, 1
      %s32 = scalar_select %p31, 0, %s30
      %s33 = sadd.s32 1, %s24
      %s34 = scalar_select %p31, %s33, %s24
      %p35 = scmp.ge.s32.totalorder %s34, 2
      %s36 = scalar_select %p35, 0, %s34
      %s37 = ssub.s32 %s24, %s36
      %p38 = scmp.eq.s32.totalorder %s37, 0
      %s40 = sadd.s32 %s39, 1
      %s41 = scalar_select %p38, %s39, %s40
      %p44 = pneg %p38
      %p45 = scmp.eq.s32.totalorder %s17, 1
      %p46 = por %p44, %p45
      %p47 = scmp.ne.s32.totalorder %s39, %s42
      %p48 = scmp.eq.s32.totalorder %s17, 0
      %p49 = por %p47, %p48
      %p50 = scmp.ne.s32.totalorder %s39, %s42
      %p51 = scmp.eq.s32.totalorder %s22, 1
      %p52 = por %p50, %p51
      %p53 = scmp.ne.s32.totalorder %s42, %s43
      %p54 = scmp.eq.s32.totalorder %s22, 0
      %p55 = por %p53, %p54
      %p56 = scmp.ne.s32.totalorder %s42, %s43
      %p57 = scmp.eq.s32.totalorder %s23, 1
      %p58 = por %p56, %p57
      %p60 = scmp.ne.s32.totalorder %s43, %s59
      %p61 = scmp.eq.s32.totalorder %s23, 0
      %p62 = por %p60, %p61
      %s63 = ssub.s32 %s24, %s36
      %p64 = scmp.eq.s32.totalorder %s63, 0
      %s66 = sadd.s32 %s65, 1
      %s67 = scalar_select %p64, %s65, %s66
      %p70 = pneg %p64
      %p71 = scmp.eq.s32.totalorder %s17, 1
      %p72 = por %p70, %p71
      %p73 = scmp.ne.s32.totalorder %s65, %s68
      %p74 = scmp.eq.s32.totalorder %s17, 0
      %p75 = por %p73, %p74
      %p76 = scmp.ne.s32.totalorder %s65, %s68
      %p77 = scmp.eq.s32.totalorder %s22, 1
      %p78 = por %p76, %p77
      %p79 = scmp.ne.s32.totalorder %s68, %s69
      %p80 = scmp.eq.s32.totalorder %s22, 0
      %p81 = por %p79, %p80
      %p82 = scmp.ne.s32.totalorder %s68, %s69
      %p83 = scmp.eq.s32.totalorder %s23, 1
      %p84 = por %p82, %p83
      %p86 = scmp.ne.s32.totalorder %s69, %s85
      %p87 = scmp.eq.s32.totalorder %s23, 0
      %p88 = por %p86, %p87
      %s90 = sadd.s32 %s89, 1
      %p93 = scmp.eq.s32.totalorder %s17, 1
      %p94 = scmp.ne.s32.totalorder %s89, %s91
      %p95 = scmp.eq.s32.totalorder %s17, 0
      %p96 = por %p94, %p95
      %p97 = scmp.ne.s32.totalorder %s89, %s91
      %p98 = scmp.eq.s32.totalorder %s22, 1
      %p99 = por %p97, %p98
      %p100 = scmp.ne.s32.totalorder %s91, %s92
      %p101 = scmp.eq.s32.totalorder %s22, 0
      %p102 = por %p100, %p101
      %p103 = scmp.ne.s32.totalorder %s91, %s92
      %p104 = scmp.eq.s32.totalorder %s23, 1
      %p105 = por %p103, %p104
      %p107 = scmp.ne.s32.totalorder %s92, %s106
      %p108 = scmp.eq.s32.totalorder %s23, 0
      %p109 = por %p107, %p108
      %s110 = sadd.s32 %s24, %s25
      %s111 = sadd.s32 %s36, %s32
      %s112 = ssub.s32 %s110, %s111
      %p113 = scmp.eq.s32.totalorder %s112, 0
      %s115 = sadd.s32 %s114, 1
      %s116 = scalar_select %p113, %s114, %s115
      %p119 = pneg %p113
      %p120 = scmp.eq.s32.totalorder %s17, 1
      %p121 = por %p119, %p120
      %p122 = scmp.ne.s32.totalorder %s114, %s117
      %p123 = scmp.eq.s32.totalorder %s17, 0
      %p124 = por %p122, %p123
      %p125 = scmp.ne.s32.totalorder %s114, %s117
      %p126 = scmp.eq.s32.totalorder %s22, 1
      %p127 = por %p125, %p126
      %p128 = scmp.ne.s32.totalorder %s117, %s118
      %p129 = scmp.eq.s32.totalorder %s22, 0
      %p130 = por %p128, %p129
      %p131 = scmp.ne.s32.totalorder %s117, %s118
      %p132 = scmp.eq.s32.totalorder %s23, 1
      %p133 = por %p131, %p132
      %p135 = scmp.ne.s32.totalorder %s118, %s134
      %p136 = scmp.eq.s32.totalorder %s23, 0
      %p137 = por %p135, %p136
      %s138 = sadd.s32 %s24, %s25
      %s139 = sadd.s32 %s36, %s32
      %s140 = ssub.s32 %s138, %s139
      %p141 = scmp.eq.s32.totalorder %s140, 0
      %s143 = sadd.s32 %s142, 1
      %s144 = scalar_select %p141, %s142, %s143
      %p147 = pneg %p141
      %p148 = scmp.eq.s32.totalorder %s17, 1
      %p149 = por %p147, %p148
      %p150 = scmp.ne.s32.totalorder %s142, %s145
      %p151 = scmp.eq.s32.totalorder %s17, 0
      %p152 = por %p150, %p151
      %p153 = scmp.ne.s32.totalorder %s142, %s145
      %p154 = scmp.eq.s32.totalorder %s22, 1
      %p155 = por %p153, %p154
      %p156 = scmp.ne.s32.totalorder %s145, %s146
      %p157 = scmp.eq.s32.totalorder %s22, 0
      %p158 = por %p156, %p157
      %p159 = scmp.ne.s32.totalorder %s145, %s146
      %p160 = scmp.eq.s32.totalorder %s23, 1
      %p161 = por %p159, %p160
      %p163 = scmp.ne.s32.totalorder %s146, %s162
      %p164 = scmp.eq.s32.totalorder %s23, 0
      %p165 = por %p163, %p164
      %p166 = scmp.le.s32.totalorder 1, %s17
      %p167 = scmp.lt.s32.totalorder %s17, 3
      %p168 = pnand %p166, %p167
      %p169 = pneg %p168
      // Predicated region
      $region9: #{tpu_custom_call.1} parent=5 // pred_check
        _
      $region10: #{tpu_custom_call.1} parent=5 // pred_check_branch
        %171 = sbr.rel (%p168) target = $region12
      $region11: #{tpu_custom_call.1} parent=5 // pred_region
        %s172 = ssub.s32 %s17, 1
        // Predicated region
        $region13: #{tpu_custom_call.1} parent=11 // pred_check
          %p173 = pneg %p102
        $region14: #{tpu_custom_call.1} parent=11 // pred_check_branch
          %175 = sbr.rel (%p173) target = $region16
        $region15: #{tpu_custom_call.1} parent=11 // pred_region
          _
        $region16: #{tpu_custom_call.1} parent=11 // pred_fallthru
          _
      $region12: #{tpu_custom_call.1} parent=5 // pred_fallthru
        _
      %p176 = scmp.lt.s32.totalorder %s17, 2
      // Predicated region
      $region17: #{tpu_custom_call.1} parent=5 // pred_check
        %p177 = pneg %p176
      $region18: #{tpu_custom_call.1} parent=5 // pred_check_branch
        %179 = sbr.rel (%p177) target = $region20
      $region19: #{tpu_custom_call.1} parent=5 // pred_region
        // Predicated region
        $region21: #{tpu_custom_call.1} parent=19 // pred_check
          %p180 = pneg %p49
        $region22: #{tpu_custom_call.1} parent=19 // pred_check_branch
          %182 = sbr.rel (%p180) target = $region24
        $region23: #{tpu_custom_call.1} parent=19 // pred_region
          %p183 = scmp.lt.s32.totalorder %s24, 1
          %s184 = scalar_select %p183, %s24, 1
          %s185 = smul.addr %s184, 11
          %s186 = smul.addr %s185, 4
          %s187 = scalar_lea.vmem %s0, %s186
        $region24: #{tpu_custom_call.1} parent=19 // pred_fallthru
          _
        // Predicated region
        $region25: #{tpu_custom_call.1} parent=19 // pred_check
          %p188 = pneg %p75
        $region26: #{tpu_custom_call.1} parent=19 // pred_check_branch
          %190 = sbr.rel (%p188) target = $region28
        $region27: #{tpu_custom_call.1} parent=19 // pred_region
          %s191 = sand.u32 %s65, 1
          %s192 = scalar_lea.sflag [#allocation4], %s191
          %s193 = sand.u32 %s65, 1
          %s194 = smul.addr %s193, 44
          %s195 = scalar_lea.vmem [#allocation3], %s194
          %197 = vsyncadd %s192, 0
          %s198 = smul.addr %s24, 11
          %s199 = smul.addr %s198, 4
          %s200 = scalar_lea.hbm %s1, %s199
          %s201 = sshll.u32 %s200, 4
          %s202 = int_to_ptr.hbm [resolvable:$true] %s201
          %s203 = sshll.u32 %s195, 4
          %s204 = int_to_ptr.vmem [resolvable:$true] %s203
          %209 = dma.hbm_to_vmem [thread:$0]  %s202, 704, %s204, %s192, 64, 64, 4
        $region28: #{tpu_custom_call.1} parent=19 // pred_fallthru
          _
      $region20: #{tpu_custom_call.1} parent=5 // pred_fallthru
        _
      %p210 = scmp.le.s32.totalorder 1, %s17
      %p211 = scmp.lt.s32.totalorder %s17, 3
      %p212 = pnand %p210, %p211
      %p213 = pneg %p212
      // Predicated region
      $region29: #{tpu_custom_call.1} parent=5 // pred_check
        _
      $region30: #{tpu_custom_call.1} parent=5 // pred_check_branch
        %215 = sbr.rel (%p212) target = $region32
      $region31: #{tpu_custom_call.1} parent=5 // pred_region
        %s216 = ssub.s32 %s17, 1
        %s217 = sand.u32 %s68, 1
        %s218 = scalar_lea.sflag [#allocation4], %s217
        %s219 = sand.u32 %s68, 1
        %s220 = smul.addr %s219, 44
        %s221 = scalar_lea.vmem [#allocation3], %s220
        // Predicated region
        $region33: #{tpu_custom_call.1} parent=31 // pred_check
          %p222 = pneg %p81
        $region34: #{tpu_custom_call.1} parent=31 // pred_check_branch
          %224 = sbr.rel (%p222) target = $region36
        $region35: #{tpu_custom_call.1} parent=31 // pred_region
          %226 = dma.done %s218, 704
        $region36: #{tpu_custom_call.1} parent=31 // pred_fallthru
          _
        %p227 = scmp.lt.s32.totalorder %s26, 1
        %s228 = scalar_select %p227, %s26, 1
        %s229 = smul.addr %s228, 11
        %s230 = smul.addr %s229, 4
        %s231 = scalar_lea.vmem %s0, %s230
        %p232 = pneg %p55
        %p233 = pneg %p52
        %s234 = sand.u32 %s68, 1
        %s235 = scalar_lea.sflag [#allocation4], %s234
        %s236 = sand.u32 %s68, 1
        %s237 = smul.addr %s236, 44
        %s238 = scalar_lea.vmem [#allocation3], %s237
        %p239 = pneg %p81
        %p240 = pneg %p78
        %p241 = pneg %p102
        %p242 = pneg %p99
        %p243 = pneg %p130
        %p244 = pneg %p127
        %s245 = sadd.s32 %s26, %s27
        %s246 = smul.u32 8, %s245
        %p247 = scmp.lt.s32.totalorder %s246, 15
        %s248 = scalar_select %p247, %s246, 15
        %s249 = smul.addr %s248, 4
        %s250 = scalar_lea.vmem %s3, %s249
        %p251 = pneg %p158
        %p252 = pneg %p155
        %s253 = sand.u32 %s145, 1
        %s254 = scalar_lea.sflag [#allocation5], %s253
        %s255 = sand.u32 %s145, 1
        %s256 = smul.addr %s255, 2
        %s257 = scalar_lea.vmem [#allocation6], %s256
        %p258 = scmp.lt.s32.totalorder %s26, 1
        %s259 = scalar_select %p258, %s26, 1
        %s260 = smul.addr %s259, 11
        %s261 = smul.addr %s260, 4
        %s262 = scalar_lea.vmem %s0, %s261
        %s263 = sadd.s32 %s26, %s27
        %s264 = smul.u32 8, %s263
        %p265 = scmp.lt.s32.totalorder %s264, 15
        %s266 = scalar_select %p265, %s264, 15
        %s267 = smul.addr %s266, 4
        %s268 = scalar_lea.vmem %s3, %s267
        %s269 = sadd.s32 %s26, %s27
        %s270 = smul.u32 8, %s269
        %s271 = sadd.s32 %s26, %s27
        %s273 = smul.u32 %s27, 8
        %s274 = smul.addr %s273, 4
        %s275 = scalar_lea.vmem %s262, %s274
        %v276 = vld [vmem:[%s275] sm:$0xf]
        %vm277 = vcmask 166912
        %278 = vst.msk [vmem:[#allocation2] sm:$0xf] %vm277, %v276
        %s279 = sadd.s32 %s273, 1
        %s280 = smul.addr %s279, 4
        %s281 = scalar_lea.vmem %s262, %s280
        %v282 = vld [vmem:[%s281] sm:$0xf]
        %283 = vst.msk [vmem:[#allocation2 + $0x8] sm:$0xf] %vm277, %v282
        %s284 = sadd.s32 %s273, 2
        %s285 = smul.addr %s284, 4
        %s286 = scalar_lea.vmem %s262, %s285
        %v287 = vld [vmem:[%s286] sm:$0xf]
        %288 = vst.msk [vmem:[#allocation2 + $0x10] sm:$0xf] %vm277, %v287
        %s289 = sadd.s32 %s273, 3
        %s290 = smul.addr %s289, 4
        %s291 = scalar_lea.vmem %s262, %s290
        %v292 = vld [vmem:[%s291] sm:$0xf]
        %293 = vst.msk [vmem:[#allocation2 + $0x18] sm:$0xf] %vm277, %v292
        %s294 = sadd.s32 %s273, 4
        %s295 = smul.addr %s294, 4
        %s296 = scalar_lea.vmem %s262, %s295
        %v297 = vld [vmem:[%s296] sm:$0xf]
        %298 = vst.msk [vmem:[#allocation2 + $0x20] sm:$0xf] %vm277, %v297
        %s299 = sadd.s32 %s273, 5
        %s300 = smul.addr %s299, 4
        %s301 = scalar_lea.vmem %s262, %s300
        %v302 = vld [vmem:[%s301] sm:$0xf]
        %303 = vst.msk [vmem:[#allocation2 + $0x28] sm:$0xf] %vm277, %v302
        %s304 = sadd.s32 %s273, 6
        %s305 = smul.addr %s304, 4
        %s306 = scalar_lea.vmem %s262, %s305
        %v307 = vld [vmem:[%s306] sm:$0xf]
        %308 = vst.msk [vmem:[#allocation2 + $0x30] sm:$0xf] %vm277, %v307
        %s309 = sadd.s32 %s273, 7
        %s310 = smul.addr %s309, 4
        %s311 = scalar_lea.vmem %s262, %s310
        %v312 = vld [vmem:[%s311] sm:$0xf]
        %313 = vst.msk [vmem:[#allocation2 + $0x38] sm:$0xf] %vm277, %v312
        %s314 = smul.addr %s273, 4
        %s315 = scalar_lea.vmem %s221, %s314 [#allocation3]
        %v316 = vld [vmem:[%s315] sm:$0xf]
        %318 = vrot.lane.b32.xlu0 %v316, 21
        %v319 = vpop.permute.xlu0 %318
        %vm321 = vcmask 339112
        %322 = vst.msk [vmem:[#allocation2] sm:$0xf] %vm321, %v319
        %s323 = smul.addr %s279, 4
        %s324 = scalar_lea.vmem %s221, %s323 [#allocation3]
        %v325 = vld [vmem:[%s324] sm:$0xf]
        %327 = vrot.lane.b32.xlu0 %v325, 21
        %v328 = vpop.permute.xlu0 %327
        %330 = vst.msk [vmem:[#allocation2 + $0x8] sm:$0xf] %vm321, %v328
        %s331 = smul.addr %s284, 4
        %s332 = scalar_lea.vmem %s221, %s331 [#allocation3]
        %v333 = vld [vmem:[%s332] sm:$0xf]
        %335 = vrot.lane.b32.xlu0 %v333, 21
        %v336 = vpop.permute.xlu0 %335
        %338 = vst.msk [vmem:[#allocation2 + $0x10] sm:$0xf] %vm321, %v336
        %s339 = smul.addr %s289, 4
        %s340 = scalar_lea.vmem %s221, %s339 [#allocation3]
        %v341 = vld [vmem:[%s340] sm:$0xf]
        %343 = vrot.lane.b32.xlu0 %v341, 21
        %v344 = vpop.permute.xlu0 %343
        %346 = vst.msk [vmem:[#allocation2 + $0x18] sm:$0xf] %vm321, %v344
        %s347 = smul.addr %s294, 4
        %s348 = scalar_lea.vmem %s221, %s347 [#allocation3]
        %v349 = vld [vmem:[%s348] sm:$0xf]
        %351 = vrot.lane.b32.xlu0 %v349, 21
        %v352 = vpop.permute.xlu0 %351
        %354 = vst.msk [vmem:[#allocation2 + $0x20] sm:$0xf] %vm321, %v352
        %s355 = smul.addr %s299, 4
        %s356 = scalar_lea.vmem %s221, %s355 [#allocation3]
        %v357 = vld [vmem:[%s356] sm:$0xf]
        %359 = vrot.lane.b32.xlu0 %v357, 21
        %v360 = vpop.permute.xlu0 %359
        %362 = vst.msk [vmem:[#allocation2 + $0x28] sm:$0xf] %vm321, %v360
        %s363 = smul.addr %s304, 4
        %s364 = scalar_lea.vmem %s221, %s363 [#allocation3]
        %v365 = vld [vmem:[%s364] sm:$0xf]
        %367 = vrot.lane.b32.xlu0 %v365, 21
        %v368 = vpop.permute.xlu0 %367
        %370 = vst.msk [vmem:[#allocation2 + $0x30] sm:$0xf] %vm321, %v368
        %s371 = smul.addr %s309, 4
        %s372 = scalar_lea.vmem %s221, %s371 [#allocation3]
        %v373 = vld [vmem:[%s372] sm:$0xf]
        %375 = vrot.lane.b32.xlu0 %v373, 21
        %v376 = vpop.permute.xlu0 %375
        %378 = vst.msk [vmem:[#allocation2 + $0x38] sm:$0xf] %vm321, %v376
        %v379 = vld [vmem:[%s281] sm:$0xf]
        %381 = vrot.lane.b32.xlu0 %v379, 42
        %v382 = vpop.permute.xlu0 %381
        %vm384 = vcmask 511312
        %385 = vst.msk [vmem:[#allocation2] sm:$0xf] %vm384, %v382
        %v386 = vld [vmem:[%s286] sm:$0xf]
        %388 = vrot.lane.b32.xlu0 %v386, 42
        %v389 = vpop.permute.xlu0 %388
        %391 = vst.msk [vmem:[#allocation2 + $0x8] sm:$0xf] %vm384, %v389
        %v392 = vld [vmem:[%s291] sm:$0xf]
        %394 = vrot.lane.b32.xlu0 %v392, 42
        %v395 = vpop.permute.xlu0 %394
        %397 = vst.msk [vmem:[#allocation2 + $0x10] sm:$0xf] %vm384, %v395
        %v398 = vld [vmem:[%s296] sm:$0xf]
        %400 = vrot.lane.b32.xlu0 %v398, 42
        %v401 = vpop.permute.xlu0 %400
        %403 = vst.msk [vmem:[#allocation2 + $0x18] sm:$0xf] %vm384, %v401
        %v404 = vld [vmem:[%s301] sm:$0xf]
        %406 = vrot.lane.b32.xlu0 %v404, 42
        %v407 = vpop.permute.xlu0 %406
        %409 = vst.msk [vmem:[#allocation2 + $0x20] sm:$0xf] %vm384, %v407
        %v410 = vld [vmem:[%s306] sm:$0xf]
        %412 = vrot.lane.b32.xlu0 %v410, 42
        %v413 = vpop.permute.xlu0 %412
        %415 = vst.msk [vmem:[#allocation2 + $0x28] sm:$0xf] %vm384, %v413
        %v416 = vld [vmem:[%s311] sm:$0xf]
        %418 = vrot.lane.b32.xlu0 %v416, 42
        %v419 = vpop.permute.xlu0 %418
        %421 = vst.msk [vmem:[#allocation2 + $0x30] sm:$0xf] %vm384, %v419
        %s422 = sadd.s32 %s273, 8
        %s423 = smul.addr %s422, 4
        %s424 = scalar_lea.vmem %s262, %s423
        %v425 = vld [vmem:[%s424] sm:$0xf]
        %427 = vrot.lane.b32.xlu0 %v425, 42
        %v428 = vpop.permute.xlu0 %427
        %430 = vst.msk [vmem:[#allocation2 + $0x38] sm:$0xf] %vm384, %v428
        %v431 = vld [vmem:[%s324] sm:$0xf]
        %433 = vrot.lane.b32.xlu0 %v431, 63
        %v434 = vpop.permute.xlu0 %433
        %vm436 = vcmask 683512
        %437 = vst.msk [vmem:[#allocation2] sm:$0xf] %vm436, %v434
        %v438 = vld [vmem:[%s332] sm:$0xf]
        %440 = vrot.lane.b32.xlu0 %v438, 63
        %v441 = vpop.permute.xlu0 %440
        %443 = vst.msk [vmem:[#allocation2 + $0x8] sm:$0xf] %vm436, %v441
        %v444 = vld [vmem:[%s340] sm:$0xf]
        %446 = vrot.lane.b32.xlu0 %v444, 63
        %v447 = vpop.permute.xlu0 %446
        %449 = vst.msk [vmem:[#allocation2 + $0x10] sm:$0xf] %vm436, %v447
        %v450 = vld [vmem:[%s348] sm:$0xf]
        %452 = vrot.lane.b32.xlu0 %v450, 63
        %v453 = vpop.permute.xlu0 %452
        %455 = vst.msk [vmem:[#allocation2 + $0x18] sm:$0xf] %vm436, %v453
        %v456 = vld [vmem:[%s356] sm:$0xf]
        %458 = vrot.lane.b32.xlu0 %v456, 63
        %v459 = vpop.permute.xlu0 %458
        %461 = vst.msk [vmem:[#allocation2 + $0x20] sm:$0xf] %vm436, %v459
        %v462 = vld [vmem:[%s364] sm:$0xf]
        %464 = vrot.lane.b32.xlu0 %v462, 63
        %v465 = vpop.permute.xlu0 %464
        %467 = vst.msk [vmem:[#allocation2 + $0x28] sm:$0xf] %vm436, %v465
        %v468 = vld [vmem:[%s372] sm:$0xf]
        %470 = vrot.lane.b32.xlu0 %v468, 63
        %v471 = vpop.permute.xlu0 %470
        %473 = vst.msk [vmem:[#allocation2 + $0x30] sm:$0xf] %vm436, %v471
        %s474 = smul.addr %s422, 4
        %s475 = scalar_lea.vmem %s221, %s474 [#allocation3]
        %v476 = vld [vmem:[%s475] sm:$0xf]
        %478 = vrot.lane.b32.xlu0 %v476, 63
        %v479 = vpop.permute.xlu0 %478
        %481 = vst.msk [vmem:[#allocation2 + $0x38] sm:$0xf] %vm436, %v479
        %v482 = vld [vmem:[%s286] sm:$0xf]
        %484 = vrot.lane.b32.xlu0 %v482, 84
        %v485 = vpop.permute.xlu0 %484
        %vm487 = vcmask 855712
        %488 = vst.msk [vmem:[#allocation2] sm:$0xf] %vm487, %v485
        %v489 = vld [vmem:[%s291] sm:$0xf]
        %491 = vrot.lane.b32.xlu0 %v489, 84
        %v492 = vpop.permute.xlu0 %491
        %494 = vst.msk [vmem:[#allocation2 + $0x8] sm:$0xf] %vm487, %v492
        %v495 = vld [vmem:[%s296] sm:$0xf]
        %497 = vrot.lane.b32.xlu0 %v495, 84
        %v498 = vpop.permute.xlu0 %497
        %500 = vst.msk [vmem:[#allocation2 + $0x10] sm:$0xf] %vm487, %v498
        %v501 = vld [vmem:[%s301] sm:$0xf]
        %503 = vrot.lane.b32.xlu0 %v501, 84
        %v504 = vpop.permute.xlu0 %503
        %506 = vst.msk [vmem:[#allocation2 + $0x18] sm:$0xf] %vm487, %v504
        %v507 = vld [vmem:[%s306] sm:$0xf]
        %509 = vrot.lane.b32.xlu0 %v507, 84
        %v510 = vpop.permute.xlu0 %509
        %512 = vst.msk [vmem:[#allocation2 + $0x20] sm:$0xf] %vm487, %v510
        %v513 = vld [vmem:[%s311] sm:$0xf]
        %515 = vrot.lane.b32.xlu0 %v513, 84
        %v516 = vpop.permute.xlu0 %515
        %518 = vst.msk [vmem:[#allocation2 + $0x28] sm:$0xf] %vm487, %v516
        %v519 = vld [vmem:[%s424] sm:$0xf]
        %521 = vrot.lane.b32.xlu0 %v519, 84
        %v522 = vpop.permute.xlu0 %521
        %524 = vst.msk [vmem:[#allocation2 + $0x30] sm:$0xf] %vm487, %v522
        %s525 = sadd.s32 %s273, 9
        %s526 = smul.addr %s525, 4
        %s527 = scalar_lea.vmem %s262, %s526
        %v528 = vld [vmem:[%s527] sm:$0xf]
        %530 = vrot.lane.b32.xlu0 %v528, 84
        %v531 = vpop.permute.xlu0 %530
        %533 = vst.msk [vmem:[#allocation2 + $0x38] sm:$0xf] %vm487, %v531
        %v534 = vld [vmem:[%s332] sm:$0xf]
        %536 = vrot.lane.b32.xlu0 %v534, 105
        %v537 = vpop.permute.xlu0 %536
        %vm539 = vcmask 1027912
        %540 = vst.msk [vmem:[#allocation2] sm:$0xf] %vm539, %v537
        %v541 = vld [vmem:[%s340] sm:$0xf]
        %543 = vrot.lane.b32.xlu0 %v541, 105
        %v544 = vpop.permute.xlu0 %543
        %546 = vst.msk [vmem:[#allocation2 + $0x8] sm:$0xf] %vm539, %v544
        %v547 = vld [vmem:[%s348] sm:$0xf]
        %549 = vrot.lane.b32.xlu0 %v547, 105
        %v550 = vpop.permute.xlu0 %549
        %552 = vst.msk [vmem:[#allocation2 + $0x10] sm:$0xf] %vm539, %v550
        %v553 = vld [vmem:[%s356] sm:$0xf]
        %555 = vrot.lane.b32.xlu0 %v553, 105
        %v556 = vpop.permute.xlu0 %555
        %558 = vst.msk [vmem:[#allocation2 + $0x18] sm:$0xf] %vm539, %v556
        %v559 = vld [vmem:[%s364] sm:$0xf]
        %561 = vrot.lane.b32.xlu0 %v559, 105
        %v562 = vpop.permute.xlu0 %561
        %564 = vst.msk [vmem:[#allocation2 + $0x20] sm:$0xf] %vm539, %v562
        %v565 = vld [vmem:[%s372] sm:$0xf]
        %567 = vrot.lane.b32.xlu0 %v565, 105
        %v568 = vpop.permute.xlu0 %567
        %570 = vst.msk [vmem:[#allocation2 + $0x28] sm:$0xf] %vm539, %v568
        %v571 = vld [vmem:[%s475] sm:$0xf]
        %573 = vrot.lane.b32.xlu0 %v571, 105
        %v574 = vpop.permute.xlu0 %573
        %576 = vst.msk [vmem:[#allocation2 + $0x30] sm:$0xf] %vm539, %v574
        %s577 = smul.addr %s525, 4
        %s578 = scalar_lea.vmem %s221, %s577 [#allocation3]
        %v579 = vld [vmem:[%s578] sm:$0xf]
        %581 = vrot.lane.b32.xlu0 %v579, 105
        %v582 = vpop.permute.xlu0 %581
        %584 = vst.msk [vmem:[#allocation2 + $0x38] sm:$0xf] %vm539, %v582
        %v585 = vld [vmem:[%s291] sm:$0xf]
        %587 = vrot.lane.b32.xlu0 %v585, 126
        %v588 = vpop.permute.xlu0 %587
        %v589 = vrot.slane %v588, 4
        %vm590 = vcmask 1031168
        %v591 = vsel %vm590, %v589, %v588
        %vm593 = vcmask 1044464
        %vm594 = vcmask 154628
        %vm595 = vmor %vm594, %vm593
        %596 = vst.msk [vmem:[#allocation2] sm:$0xff] %vm595, %v591
        %v597 = vld [vmem:[%s296] sm:$0xf]
        %599 = vrot.lane.b32.xlu0 %v597, 126
        %v600 = vpop.permute.xlu0 %599
        %v601 = vrot.slane %v600, 4
        %v602 = vsel %vm590, %v601, %v600
        %604 = vst.msk [vmem:[#allocation2 + $0x8] sm:$0xff] %vm595, %v602
        %v605 = vld [vmem:[%s301] sm:$0xf]
        %607 = vrot.lane.b32.xlu0 %v605, 126
        %v608 = vpop.permute.xlu0 %607
        %v609 = vrot.slane %v608, 4
        %v610 = vsel %vm590, %v609, %v608
        %612 = vst.msk [vmem:[#allocation2 + $0x10] sm:$0xff] %vm595, %v610
        %v613 = vld [vmem:[%s306] sm:$0xf]
        %615 = vrot.lane.b32.xlu0 %v613, 126
        %v616 = vpop.permute.xlu0 %615
        %v617 = vrot.slane %v616, 4
        %v618 = vsel %vm590, %v617, %v616
        %620 = vst.msk [vmem:[#allocation2 + $0x18] sm:$0xff] %vm595, %v618
        %v621 = vld [vmem:[%s311] sm:$0xf]
        %623 = vrot.lane.b32.xlu0 %v621, 126
        %v624 = vpop.permute.xlu0 %623
        %v625 = vrot.slane %v624, 4
        %v626 = vsel %vm590, %v625, %v624
        %628 = vst.msk [vmem:[#allocation2 + $0x20] sm:$0xff] %vm595, %v626
        %v629 = vld [vmem:[%s424] sm:$0xf]
        %631 = vrot.lane.b32.xlu0 %v629, 126
        %v632 = vpop.permute.xlu0 %631
        %v633 = vrot.slane %v632, 4
        %v634 = vsel %vm590, %v633, %v632
        %636 = vst.msk [vmem:[#allocation2 + $0x28] sm:$0xff] %vm595, %v634
        %v637 = vld [vmem:[%s527] sm:$0xf]
        %639 = vrot.lane.b32.xlu0 %v637, 126
        %v640 = vpop.permute.xlu0 %639
        %v641 = vrot.slane %v640, 4
        %v642 = vsel %vm590, %v641, %v640
        %644 = vst.msk [vmem:[#allocation2 + $0x30] sm:$0xff] %vm595, %v642
        %s645 = sadd.s32 %s273, 10
        %s646 = smul.addr %s645, 4
        %s647 = scalar_lea.vmem %s262, %s646
        %v648 = vld [vmem:[%s647] sm:$0xf]
        %650 = vrot.lane.b32.xlu0 %v648, 126
        %v651 = vpop.permute.xlu0 %650
        %v652 = vrot.slane %v651, 4
        %v653 = vsel %vm590, %v652, %v651
        %655 = vst.msk [vmem:[#allocation2 + $0x38] sm:$0xff] %vm595, %v653
        %v656 = vld [vmem:[#allocation2] sm:$0xff]
        %v657 = vld [vmem:[#allocation2 + $0x8] sm:$0xff]
        %v658 = vld [vmem:[#allocation2 + $0x10] sm:$0xff]
        %v659 = vld [vmem:[#allocation2 + $0x18] sm:$0xff]
        %v660 = vld [vmem:[#allocation2 + $0x20] sm:$0xff]
        %v661 = vld [vmem:[#allocation2 + $0x28] sm:$0xff]
        %v662 = vld [vmem:[#allocation2 + $0x30] sm:$0xff]
        %v663 = vld [vmem:[#allocation2 + $0x38] sm:$0xff]
        %v664 = vld [vmem:[%s2] sm:$0xf]
        %v665 = vld [vmem:[%s2 + $0x4] sm:$0xf]
        %v666 = vld [vmem:[%s2 + $0x8] sm:$0xf]
        %v667 = vld [vmem:[%s2 + $0xc] sm:$0xf]
        %v668 = vld [vmem:[%s2 + $0x10] sm:$0xf]
        %v669 = vld [vmem:[%s2 + $0x14] sm:$0xf]
        %v670 = vld [vmem:[%s2 + $0x18] sm:$0xf]
        %v671 = vld [vmem:[%s2 + $0x1c] sm:$0xf]
        %v672 = vld [vmem:[%s2 + $0x20] sm:$0xf]
        %v673 = vld [vmem:[%s2 + $0x24] sm:$0xf]
        %v674 = vld [vmem:[%s2 + $0x28] sm:$0xf]
        %v675 = vld [vmem:[%s2 + $0x2c] sm:$0xf]
        %v676 = vld [vmem:[%s2 + $0x30] sm:$0xf]
        %v677 = vld [vmem:[%s2 + $0x34] sm:$0xf]
        %v678 = vld [vmem:[%s2 + $0x38] sm:$0xf]
        %v679 = vld [vmem:[%s2 + $0x3c] sm:$0xf]
        %v680 = vld [vmem:[%s2 + $0x40] sm:$0xf]
        %v681 = vld [vmem:[%s2 + $0x44] sm:$0xf]
        %v682 = vld [vmem:[%s2 + $0x48] sm:$0x3]
        %v691 = vunpack.c.l.b16 %v656
        %v692 = vunpack.c.h.b16 %v656
        %v693 = vunpack.c.l.b16 %v657
        %v694 = vunpack.c.h.b16 %v657
        %v695 = vunpack.c.l.b16 %v658
        %v696 = vunpack.c.h.b16 %v658
        %v697 = vunpack.c.l.b16 %v659
        %v698 = vunpack.c.h.b16 %v659
        %v699 = vunpack.c.l.b16 %v660
        %v700 = vunpack.c.h.b16 %v660
        %v701 = vunpack.c.l.b16 %v661
        %v702 = vunpack.c.h.b16 %v661
        %v703 = vunpack.c.l.b16 %v662
        %v704 = vunpack.c.h.b16 %v662
        %v705 = vunpack.c.l.b16 %v663
        %v706 = vunpack.c.h.b16 %v663
        %v707 = vpack.c.b16 %v693, %v691
        %v708 = vpack.c.b16 %v694, %v692
        %v709 = vpack.c.b16 %v697, %v695
        %v710 = vpack.c.b16 %v698, %v696
        %v711 = vpack.c.b16 %v701, %v699
        %v712 = vpack.c.b16 %v702, %v700
        %v713 = vpack.c.b16 %v705, %v703
        %v714 = vpack.c.b16 %v706, %v704
        %v738 = vunpack.c.l.b16 %v664
        %v739 = vunpack.c.l.b16 %v665
        %v740 = vunpack.c.l.b16 %v666
        %v741 = vunpack.c.l.b16 %v667
        %v742 = vunpack.c.l.b16 %v668
        %v743 = vunpack.c.l.b16 %v669
        %v744 = vunpack.c.l.b16 %v670
        %v745 = vunpack.c.l.b16 %v671
        %v746 = vunpack.c.l.b16 %v672
        %v747 = vunpack.c.l.b16 %v673
        %v748 = vunpack.c.l.b16 %v674
        %v749 = vunpack.c.l.b16 %v675
        %v750 = vunpack.c.l.b16 %v676
        %v751 = vunpack.c.l.b16 %v677
        %v752 = vunpack.c.l.b16 %v678
        %v753 = vunpack.c.l.b16 %v679
        %v754 = vunpack.c.l.b16 %v680
        %v755 = vunpack.c.l.b16 %v681
        %v756 = vunpack.c.l.b16 %v682
        %v757 = vpack.c.b16 %v739, %v738
        %v758 = vpack.c.b16 %v741, %v740
        %v759 = vpack.c.b16 %v743, %v742
        %v760 = vpack.c.b16 %v745, %v744
        %v761 = vpack.c.b16 %v747, %v746
        %v762 = vpack.c.b16 %v749, %v748
        %v763 = vpack.c.b16 %v751, %v750
        %v764 = vpack.c.b16 %v753, %v752
        %v765 = vpack.c.b16 %v755, %v754
        %v766 = vpack.c.b16 %v756, %v756
        %vm776 = vcmask 154624
        %v778 = vsel %vm776, %v708, 0
        %v781 = vsel %vm776, %v710, 0
        %v784 = vsel %vm776, %v712, 0
        %v787 = vsel %vm776, %v714, 0
        %vm789 = vcmask 1040384
        %vm790 = vcmask 1041408
        %v791 = vsel %vm789, 4294967295, 65535
        %v792 = vsel %vm790, %v791, 0
        %v794 = vand.u32 %v766, %v792
        %796 = vmatpush.bf16.msra.mxu0 %v764
        %797 = vmatpush.bf16.msra.mxu0 %v763
        %798 = vmatpush.bf16.msra.mxu0 %v762
        %799 = vmatpush.bf16.msra.mxu0 %v761
        %800 = vmatpush.bf16.msra.mxu0 %v760
        %801 = vmatpush.bf16.msra.mxu0 %v759
        %802 = vmatpush.bf16.msra.mxu0 %v758
        %803 = vmatpush.bf16.msra.mxu0 %v757
        %804 = vmatmul.bf16.gmra.mxu0 %v707
        %v805 = vpop.f32.mrf.mxu0
        %v806 = vadd.f32 0.0, %v805
        %v807 = vpop.f32.mrf.mxu0
        %v808 = vadd.f32 0.0, %v807
        %809 = vmatmul.bf16.gmra.mxu0 %v709
        %v810 = vpop.f32.mrf.mxu0
        %v811 = vadd.f32 0.0, %v810
        %v812 = vpop.f32.mrf.mxu0
        %v813 = vadd.f32 0.0, %v812
        %814 = vmatmul.bf16.gmra.mxu0 %v711
        %v815 = vpop.f32.mrf.mxu0
        %v816 = vadd.f32 0.0, %v815
        %v817 = vpop.f32.mrf.mxu0
        %v818 = vadd.f32 0.0, %v817
        %819 = vmatmul.bf16.gmra.mxu0 %v713
        %v820 = vpop.f32.mrf.mxu0
        %v821 = vadd.f32 0.0, %v820
        %v822 = vpop.f32.mrf.mxu0
        %v823 = vadd.f32 0.0, %v822
        %824 = vdwg.mxu0
        %825 = vmatpush.bf16.msra.mxu0 0
        %826 = vmatpush.bf16.msra.mxu0 0
        %827 = vmatpush.bf16.msra.mxu0 0
        %828 = vmatpush.bf16.msra.mxu0 0
        %829 = vmatpush.bf16.msra.mxu0 0
        %830 = vmatpush.bf16.msra.mxu0 0
        %831 = vmatpush.bf16.msra.mxu0 %v794
        %832 = vmatpush.bf16.msra.mxu0 %v765
        %833 = vmatmul.bf16.gmra.mxu0 %v778
        %v834 = vpop.f32.mrf.mxu0
        %v835 = vadd.f32 %v806, %v834
        %v836 = vpop.f32.mrf.mxu0
        %v837 = vadd.f32 %v808, %v836
        %838 = vmatmul.bf16.gmra.mxu0 %v781
        %v839 = vpop.f32.mrf.mxu0
        %v840 = vadd.f32 %v811, %v839
        %v841 = vpop.f32.mrf.mxu0
        %v842 = vadd.f32 %v813, %v841
        %843 = vmatmul.bf16.gmra.mxu0 %v784
        %v844 = vpop.f32.mrf.mxu0
        %v845 = vadd.f32 %v816, %v844
        %v846 = vpop.f32.mrf.mxu0
        %v847 = vadd.f32 %v818, %v846
        %848 = vmatmul.bf16.gmra.mxu0 %v787
        %v849 = vpop.f32.mrf.mxu0
        %v850 = vadd.f32 %v821, %v849
        %v851 = vpop.f32.mrf.mxu0
        %v852 = vadd.f32 %v823, %v851
        %853 = vdwg.mxu0
        %v854 = vpack.c.bf16 %v835, %v835
        %v855 = vpack.c.bf16 %v837, %v837
        %v856 = vpack.c.bf16 %v840, %v840
        %v857 = vpack.c.bf16 %v842, %v842
        %v858 = vpack.c.bf16 %v845, %v845
        %v859 = vpack.c.bf16 %v847, %v847
        %v860 = vpack.c.bf16 %v850, %v850
        %v861 = vpack.c.bf16 %v852, %v852
        %vm862 = vcmask 519168
        %863 = vst.msk [vmem:[%s268] sm:$0xf] %vm862, %v854
        %864 = vst.msk [vmem:[%s268 + $0x4] sm:$0xf] %vm862, %v855
        %865 = vst.msk [vmem:[%s268 + $0x8] sm:$0xf] %vm862, %v856
        %866 = vst.msk [vmem:[%s268 + $0xc] sm:$0xf] %vm862, %v857
        %867 = vst.msk [vmem:[%s268 + $0x10] sm:$0xf] %vm862, %v858
        %868 = vst.msk [vmem:[%s268 + $0x14] sm:$0xf] %vm862, %v859
        %869 = vst.msk [vmem:[%s268 + $0x18] sm:$0xf] %vm862, %v860
        %870 = vst.msk [vmem:[%s268 + $0x1c] sm:$0xf] %vm862, %v861
        %vm871 = vcmask 523264
        %v872 = vsel %vm871, %v835, 0.0
        %v873 = vsel %vm871, %v837, 0.0
        %v874 = vadd.f32 %v872, %v873
        %v875 = vsel %vm871, %v840, 0.0
        %v876 = vadd.f32 %v874, %v875
        %v877 = vsel %vm871, %v842, 0.0
        %v878 = vadd.f32 %v876, %v877
        %v879 = vsel %vm871, %v845, 0.0
        %v880 = vadd.f32 %v878, %v879
        %v881 = vsel %vm871, %v847, 0.0
        %v882 = vadd.f32 %v880, %v881
        %v883 = vsel %vm871, %v850, 0.0
        %v884 = vadd.f32 %v882, %v883
        %v885 = vsel %vm871, %v852, 0.0
        %v886 = vadd.f32 %v884, %v885
        %v887 = vrot.slane %v886, 4
        %v888 = vadd.f32 %v886, %v887
        %v889 = vrot.slane %v888, 2
        %v890 = vadd.f32 %v888, %v889
        %v891 = vrot.slane %v890, 1
        %v892 = vadd.f32 %v890, %v891
        %vm893 = vcmask 516096
        %894 = vst.msk [vmem:[%s257] sm:$0x1] %vm893, %v892
        %v895 = vmul.f32 %v835, %v835
        %v896 = vmul.f32 %v837, %v837
        %v897 = vmul.f32 %v840, %v840
        %v898 = vmul.f32 %v842, %v842
        %v899 = vmul.f32 %v845, %v845
        %v900 = vmul.f32 %v847, %v847
        %v901 = vmul.f32 %v850, %v850
        %v902 = vmul.f32 %v852, %v852
        %v903 = vsel %vm871, %v895, 0.0
        %v904 = vsel %vm871, %v896, 0.0
        %v905 = vadd.f32 %v903, %v904
        %v906 = vsel %vm871, %v897, 0.0
        %v907 = vadd.f32 %v905, %v906
        %v908 = vsel %vm871, %v898, 0.0
        %v909 = vadd.f32 %v907, %v908
        %v910 = vsel %vm871, %v899, 0.0
        %v911 = vadd.f32 %v909, %v910
        %v912 = vsel %vm871, %v900, 0.0
        %v913 = vadd.f32 %v911, %v912
        %v914 = vsel %vm871, %v901, 0.0
        %v915 = vadd.f32 %v913, %v914
        %v916 = vsel %vm871, %v902, 0.0
        %v917 = vadd.f32 %v915, %v916
        %v918 = vrot.slane %v917, 4
        %v919 = vadd.f32 %v917, %v918
        %v920 = vrot.slane %v919, 2
        %v921 = vadd.f32 %v919, %v920
        %v922 = vrot.slane %v921, 1
        %v923 = vadd.f32 %v921, %v922
        %924 = vst.msk [vmem:[%s257 + $0x1] sm:$0x1] %vm893, %v923
        %s925 = sadd.s32 %s26, %s27
        %s926 = smul.u32 8, %s925
        %p927 = scmp.lt.s32.totalorder %s926, 15
        %s928 = scalar_select %p927, %s926, 15
        %s929 = smul.addr %s928, 4
        %s930 = scalar_lea.vmem %s3, %s929
        %s931 = sand.u32 %s145, 1
        %s932 = scalar_lea.sflag [#allocation5], %s931
        %s933 = sand.u32 %s145, 1
        %s934 = smul.addr %s933, 2
        %s935 = scalar_lea.vmem [#allocation6], %s934
        // Predicated region
        $region37: #{tpu_custom_call.1} parent=31 // pred_check
          %p936 = pneg %p127
        $region38: #{tpu_custom_call.1} parent=31 // pred_check_branch
          %938 = sbr.rel (%p936) target = $region40
        $region39: #{tpu_custom_call.1} parent=31 // pred_region
          %s939 = sadd.s32 %s26, %s27
          %s940 = smul.u32 8, %s939
        $region40: #{tpu_custom_call.1} parent=31 // pred_fallthru
          _
        // Predicated region
        $region41: #{tpu_custom_call.1} parent=31 // pred_check
          %p941 = pneg %p155
        $region42: #{tpu_custom_call.1} parent=31 // pred_check_branch
          %943 = sbr.rel (%p941) target = $region44
        $region43: #{tpu_custom_call.1} parent=31 // pred_region
          %s944 = sadd.s32 %s26, %s27
          %946 = vsyncadd %s932, 0
          %s947 = smul.addr %s944, 2
          %s948 = scalar_lea.hbm %s4, %s947
          %s950 = sshll.u32 %s935, 4
          %s951 = int_to_ptr.vmem [resolvable:$true] %s950
          %s952 = sshll.u32 %s948, 4
          %s953 = int_to_ptr.hbm [resolvable:$true] %s952
          %955 = dma.vmem_to_hbm [thread:$0]  %s951, 32, %s953, %s932
        $region44: #{tpu_custom_call.1} parent=31 // pred_fallthru
          _
      $region32: #{tpu_custom_call.1} parent=5 // pred_fallthru
        _
      %p956 = scmp.le.s32.totalorder 2, %s17
      // Predicated region
      $region45: #{tpu_custom_call.1} parent=5 // pred_check
        %p957 = pneg %p956
      $region46: #{tpu_custom_call.1} parent=5 // pred_check_branch
        %959 = sbr.rel (%p957) target = $region48
      $region47: #{tpu_custom_call.1} parent=5 // pred_region
        %s960 = ssub.s32 %s17, 2
        // Predicated region
        $region49: #{tpu_custom_call.1} parent=47 // pred_check
          %p961 = pneg %p133
        $region50: #{tpu_custom_call.1} parent=47 // pred_check_branch
          %963 = sbr.rel (%p961) target = $region52
        $region51: #{tpu_custom_call.1} parent=47 // pred_region
          %s964 = sadd.s32 %s28, %s29
          %s965 = smul.u32 8, %s964
          %p966 = scmp.lt.s32.totalorder %s965, 15
          %s967 = scalar_select %p966, %s965, 15
          %s968 = smul.addr %s967, 4
          %s969 = scalar_lea.vmem %s3, %s968
        $region52: #{tpu_custom_call.1} parent=47 // pred_fallthru
          _
        // Predicated region
        $region53: #{tpu_custom_call.1} parent=47 // pred_check
          %p970 = pneg %p161
        $region54: #{tpu_custom_call.1} parent=47 // pred_check_branch
          %972 = sbr.rel (%p970) target = $region56
        $region55: #{tpu_custom_call.1} parent=47 // pred_region
          %s973 = sand.u32 %s146, 1
          %s974 = scalar_lea.sflag [#allocation5], %s973
          %s975 = sand.u32 %s146, 1
          %s976 = smul.addr %s975, 2
          %s977 = scalar_lea.vmem [#allocation6], %s976
          %979 = dma.done %s974, 32
        $region56: #{tpu_custom_call.1} parent=47 // pred_fallthru
          _
      $region48: #{tpu_custom_call.1} parent=5 // pred_fallthru
        _
    $region6: #{tpu_custom_call.1} parent=1 // loop_footer
      %s21 = sadd.s32 1, %s17
    $region7: #{tpu_custom_call.1} parent=1 // loop_footer_branch
      %16 = sbr.rel target = $region3
    $region8: #{tpu_custom_call.1} parent=1 // loop_exit
      _
    %980 = vsyncpa [#allocation4], 1
    %s981 = scalar_lea.sflag [#allocation4], 1
    %982 = vsyncpa %s981, 1
    %983 = vsyncpa [#allocation5], 1
    %s984 = scalar_lea.sflag [#allocation5], 1
    %985 = vsyncpa %s984, 1

</llo_original>
